<compile_context>
chip_gen: v7x
topology: tpu7x:2x2x1
jax: 0.10.0
libtpu: 0.0.40
codegen_flags: <defaults>
</compile_context>

<pallas_src>
import jax
import jax.numpy as jnp
from jax.experimental import pallas as pl
from jax.experimental.pallas import tpu as pltpu


def _round_up(x, m):
    return (x + m - 1) // m * m


def _row_layout(n, p, norm):
    """Per-sample padded row count and row-tile size for the folded [N*P, K] matmul."""
    p8 = _round_up(p, 8)
    if norm or n * p8 <= 1024:
        # Norm layers need the whole (small) row block resident for per-sample stats.
        return p8, n * p8
    tr = 512
    return _round_up(p, tr), tr


def _pick_tk(k_pad, tr, c_pad):
    """Largest K tile dividing k_pad whose double-buffered bf16 blocks stay small."""
    for cand in (4096, 2048, 1024, 512, 256, 128):
        if (k_pad % cand == 0
                and tr * cand * 2 <= 4 * 1024 * 1024        # patch block (bf16)
                and cand * c_pad * 2 <= 4 * 1024 * 1024):   # weight block (bf16)
            return cand
    return 128


def _make_kernel(norm, act, n_samples, p_pad, p_true):
    """Fused (rows @ W) f32-accumulated into o_ref, then bias [+ IN] [+ LeakyReLU]."""
    inv_p = 1.0 / float(p_true)

    def kernel(p_ref, w_ref, b_ref, o_ref):
        k = pl.program_id(1)

        @pl.when(k == 0)
        def _():
            o_ref[...] = jnp.zeros_like(o_ref)

        # bf16 x bf16 matmul, f32 accumulate directly into the resident output block.
        o_ref[...] += jnp.dot(p_ref[...], w_ref[...],
                              preferred_element_type=jnp.float32)

        @pl.when(k == pl.num_programs(1) - 1)
        def _():
            y = o_ref[...] + b_ref[...]                      # [tr, C_pad] f32
            if norm:
                # InstanceNorm3d(affine=False): per-(sample, channel) stats over
                # the spatial rows.  Batch is folded into the row dim, so walk
                # the static per-sample slabs; one-pass sum / sum-of-squares.
                for n in range(n_samples):
                    lo = n * p_pad
                    yn = y[lo:lo + p_pad, :]
                    if p_pad == p_true:
                        s1 = jnp.sum(yn, axis=0, keepdims=True)
                        s2 = jnp.sum(yn * yn, axis=0, keepdims=True)
                    else:
                        rows = jax.lax.broadcasted_iota(jnp.int32, yn.shape, 0)
                        msk = rows < p_true
                        ym = jnp.where(msk, yn, 0.0)
                        s1 = jnp.sum(ym, axis=0, keepdims=True)
                        s2 = jnp.sum(ym * ym, axis=0, keepdims=True)
                    mean = s1 * inv_p
                    var = s2 * inv_p - mean * mean
                    yn = (yn - mean) * jax.lax.rsqrt(var + 1e-5)
                    if act:
                        yn = jnp.where(yn >= 0.0, yn, 0.2 * yn)   # LeakyReLU(0.2)
                    o_ref[lo:lo + p_pad, :] = yn
            else:
                if act:
                    y = jnp.where(y >= 0.0, y, 0.2 * y)
                o_ref[...] = y

    return kernel


def _conv_matmul(patches, w_mat, bias, norm, act):
    """patches: [N, P, K] bf16, w_mat: [K, Cout], bias: [Cout] -> [N, P, Cout] f32."""
    N, P, K = patches.shape
    Cout = w_mat.shape[1]
    C_pad = _round_up(Cout, 128)
    P_pad, tr = _row_layout(N, P, norm)
    K_pad = _round_up(K, 128)
    tk = _pick_tk(K_pad, tr, C_pad)

    p_p = jnp.pad(patches.astype(jnp.bfloat16),
                  ((0, 0), (0, P_pad - P), (0, K_pad - K)))
    p_2d = p_p.reshape(N * P_pad, K_pad)
    w_p = jnp.pad(w_mat, ((0, K_pad - K), (0, C_pad - Cout))).astype(jnp.bfloat16)
    b_p = jnp.pad(bias, (0, C_pad - Cout)).astype(jnp.float32).reshape(1, C_pad)

    R = N * P_pad
    out = pl.pallas_call(
        _make_kernel(norm, act, N, P_pad, P),
        out_shape=jax.ShapeDtypeStruct((R, C_pad), jnp.float32),
        grid_spec=pltpu.PrefetchScalarGridSpec(
            num_scalar_prefetch=0,
            grid=(R // tr, K_pad // tk),
            in_specs=[
                pl.BlockSpec((tr, tk), lambda r, k: (r, k)),      # patch rows
                pl.BlockSpec((tk, C_pad), lambda r, k: (k, 0)),   # weights (streamed once)
                pl.BlockSpec((1, C_pad), lambda r, k: (0, 0)),    # bias
            ],
            out_specs=pl.BlockSpec((tr, C_pad), lambda r, k: (r, 0)),
        ),
        compiler_params=pltpu.CompilerParams(
            dimension_semantics=("parallel", "arbitrary"),
            vmem_limit_bytes=32 * 1024 * 1024),
    )(p_2d, w_p, b_p)

    return out.reshape(N, P_pad, C_pad)[:, :P, :Cout]


def _im2col3d(x, k, stride):
    """x: [N, C, D, H, W] -> patches [N, P, C*k^3] matching torch weight layout."""
    N, C, D, H, W = x.shape
    Do = (D - k) // stride + 1
    Ho = (H - k) // stride + 1
    Wo = (W - k) // stride + 1
    cols = []
    for dz in range(k):
        for dy in range(k):
            for dx in range(k):
                cols.append(x[:, :,
                              dz:dz + stride * (Do - 1) + 1:stride,
                              dy:dy + stride * (Ho - 1) + 1:stride,
                              dx:dx + stride * (Wo - 1) + 1:stride])
    p = jnp.stack(cols, axis=2)            # [N, C, k^3, Do, Ho, Wo]
    p = p.transpose(0, 3, 4, 5, 1, 2)      # [N, Do, Ho, Wo, C, k^3]
    return p.reshape(N, Do * Ho * Wo, C * k ** 3), (Do, Ho, Wo)


def leaky_conv3d_block(x, weight, bias, *, stride, padding, norm, act=True):
    """ReplicationPad3d(padding) -> Conv3d(k, stride, padding=padding) -> [IN] -> [LeakyReLU]."""
    Cout, Cin, k, _, _ = weight.shape
    x = x.astype(jnp.bfloat16)             # bf16 activations halve im2col HBM traffic
    if padding > 0:
        pad = ((0, 0), (0, 0)) + ((padding, padding),) * 3
        x = jnp.pad(x, pad, mode="edge")   # ReplicationPad3d(padding)
        x = jnp.pad(x, pad)                # Conv3d's own zero padding
    patches, (Do, Ho, Wo) = _im2col3d(x, k, stride)
    w_mat = weight.reshape(Cout, Cin * k ** 3).T
    N = x.shape[0]
    y = _conv_matmul(patches, w_mat, bias, norm, act)   # [N, P, Cout] f32
    return y.reshape(N, Do, Ho, Wo, Cout).transpose(0, 4, 1, 2, 3)


def discriminator_forward(x, params):
    (w1, b1), (w2, b2), (w3, b3), (w4, b4), (w5, b5) = params
    h = leaky_conv3d_block(x, w1, b1, stride=2, padding=1, norm=False)
    h = leaky_conv3d_block(h, w2, b2, stride=2, padding=1, norm=True)
    h = leaky_conv3d_block(h, w3, b3, stride=2, padding=1, norm=True)
    h = leaky_conv3d_block(h, w4, b4, stride=1, padding=0, norm=True)
    # Final nn.Conv3d(nf*8, 1, kernel_size=1): Cout=1 over 8 voxels — a plain
    # einsum beats a Pallas call that would pad Cout to 128 lanes.
    cout, cin = w5.shape[0], w5.shape[1]
    w5m = w5.reshape(cout, cin)
    h = jnp.einsum('ncdhw,oc->nodhw', h, w5m) + b5.reshape(1, cout, 1, 1, 1)
    return h


def init_params(key, in_channels=1):
    # gaussian_weights_init: normal(0, 0.02) on conv weights (synthetic, deterministic).
    nf = 64
    shapes = [
        (nf, in_channels, 4, 4, 4),
        (nf * 2, nf, 4, 4, 4),
        (nf * 4, nf * 2, 4, 4, 4),
        (nf * 8, nf * 4, 4, 4, 4),
        (1, nf * 8, 1, 1, 1),
    ]
    params = []
    for s in shapes:
        key, kw, kb = jax.random.split(key, 3)
        w = 0.02 * jax.random.normal(kw, s, jnp.float32)
        b = 0.01 * jax.random.normal(kb, (s[0],), jnp.float32)
        params.append((w, b))
    return params


if __name__ == "__main__":
    key = jax.random.PRNGKey(0)
    kx, kp = jax.random.split(key)
    # Spatial 32 is the smallest "nice" size: 16 would shrink to 0 spatial at
    # the stride-1 k=4 layer (32 -> 17 -> 9 -> 5 -> 2 -> 2).
    x = jax.random.normal(kx, (2, 1, 32, 32, 32), jnp.float32)
    params = init_params(kp)
    out = discriminator_forward(x, params)
    out = jax.block_until_ready(out)
    assert out.shape == (2, 1, 2, 2, 2), out.shape
    assert jnp.all(jnp.isfinite(out))
    print("KERNEL_OK")
</pallas_src>

<mosaic_0001>
module attributes {stable_mosaic.version = 11 : i64} {
  func.func @kernel(%arg0: i32, %arg1: i32, %arg2: memref<512x128xbf16, #tpu.memory_space<vmem>>, %arg3: memref<128x128xbf16, #tpu.memory_space<vmem>>, %arg4: memref<1x128xf32, #tpu.memory_space<vmem>>, %arg5: memref<512x128xf32, #tpu.memory_space<vmem>>) attributes {dimension_semantics = [#tpu.dimension_semantics<parallel>, #tpu.dimension_semantics<arbitrary>], iteration_bounds = array<i64: 20, 1>, scalar_prefetch = 0 : i64, scratch_operands = 0 : i64, tpu.core_type = #tpu.core_type<tc>, window_params = [{transform_indices = @transform_0, window_bounds = array<i64: 512, 128>}, {transform_indices = @transform_1, window_bounds = array<i64: 128, 128>}, {pipeline_mode = #tpu.pipeline_mode<synchronous>, transform_indices = @transform_2, window_bounds = array<i64: 1, 128>}, {transform_indices = @transform_3, window_bounds = array<i64: 512, 128>}]} {
    %c0_i32 = arith.constant 0 : i32
    %0 = arith.cmpi eq, %arg1, %c0_i32 : i32
    %1 = arith.extui %0 : i1 to i32
    %c0_i32_0 = arith.constant 0 : i32
    %2 = arith.cmpi ne, %1, %c0_i32_0 : i32
    scf.if %2 {
      %cst_10 = arith.constant 0.000000e+00 : f32
      %12 = vector.broadcast %cst_10 : f32 to vector<512x128xf32>
      %c0_11 = arith.constant 0 : index
      %c0_12 = arith.constant 0 : index
      %13 = vector.load %arg5[%c0_11, %c0_12] : memref<512x128xf32, #tpu.memory_space<vmem>>, vector<512x128xf32>
      tpu.vector_store %arg5[%c0_11, %c0_12], %12 {strides = array<i32>} : memref<512x128xf32, #tpu.memory_space<vmem>>, vector<512x128xf32>,
    } else {
    }
    %c0 = arith.constant 0 : index
    %c0_1 = arith.constant 0 : index
    %3 = vector.load %arg5[%c0, %c0_1] : memref<512x128xf32, #tpu.memory_space<vmem>>, vector<512x128xf32>
    %c0_2 = arith.constant 0 : index
    %c0_3 = arith.constant 0 : index
    %4 = vector.load %arg2[%c0_2, %c0_3] : memref<512x128xbf16, #tpu.memory_space<vmem>>, vector<512x128xbf16>
    %c0_4 = arith.constant 0 : index
    %c0_5 = arith.constant 0 : index
    %5 = vector.load %arg3[%c0_4, %c0_5] : memref<128x128xbf16, #tpu.memory_space<vmem>>, vector<128x128xbf16>
    %cst = arith.constant dense<0.000000e+00> : vector<512x128xf32>
    %6 = tpu.matmul %4, %5, %cst {dimension_numbers = #tpu.dot_dimension_numbers<[1], [0], [0], [1], [0, 0, 1, 1], [], []>} : vector<512x128xbf16>, vector<128x128xbf16>, vector<512x128xf32> -> vector<512x128xf32>
    %7 = arith.addf %3, %6 : vector<512x128xf32>
    %c0_6 = arith.constant 0 : index
    %c0_7 = arith.constant 0 : index
    %8 = vector.load %arg5[%c0_6, %c0_7] : memref<512x128xf32, #tpu.memory_space<vmem>>, vector<512x128xf32>
    tpu.vector_store %arg5[%c0_6, %c0_7], %7 {strides = array<i32>} : memref<512x128xf32, #tpu.memory_space<vmem>>, vector<512x128xf32>,
    %c0_i32_8 = arith.constant 0 : i32
    %9 = arith.cmpi eq, %arg1, %c0_i32_8 : i32
    %10 = arith.extui %9 : i1 to i32
    %c0_i32_9 = arith.constant 0 : i32
    %11 = arith.cmpi ne, %10, %c0_i32_9 : i32
    scf.if %11 {
      %c0_10 = arith.constant 0 : index
      %c0_11 = arith.constant 0 : index
      %12 = vector.load %arg5[%c0_10, %c0_11] : memref<512x128xf32, #tpu.memory_space<vmem>>, vector<512x128xf32>
      %c0_12 = arith.constant 0 : index
      %c0_13 = arith.constant 0 : index
      %13 = vector.load %arg4[%c0_12, %c0_13] : memref<1x128xf32, #tpu.memory_space<vmem>>, vector<1x128xf32>
      %14 = vector.broadcast %13 : vector<1x128xf32> to vector<512x128xf32>
      %15 = arith.addf %12, %14 : vector<512x128xf32>
      %cst_14 = arith.constant 0.000000e+00 : f32
      %16 = vector.broadcast %cst_14 : f32 to vector<512x128xf32>
      %17 = arith.cmpf oge, %15, %16 : vector<512x128xf32>
      %cst_15 = arith.constant 2.000000e-01 : f32
      %18 = vector.broadcast %cst_15 : f32 to vector<512x128xf32>
      %19 = arith.mulf %18, %15 : vector<512x128xf32>
      %20 = arith.select %17, %15, %19 : vector<512x128xi1>, vector<512x128xf32>
      %c0_16 = arith.constant 0 : index
      %c0_17 = arith.constant 0 : index
      %21 = vector.load %arg5[%c0_16, %c0_17] : memref<512x128xf32, #tpu.memory_space<vmem>>, vector<512x128xf32>
      tpu.vector_store %arg5[%c0_16, %c0_17], %20 {strides = array<i32>} : memref<512x128xf32, #tpu.memory_space<vmem>>, vector<512x128xf32>,
    } else {
    }
    return
  }
  func.func @transform_0(%arg0: i32, %arg1: i32) -> (i32, i32) {
    %c0_i32 = arith.constant 0 : i32
    return %arg0, %arg1 : i32, i32
  }
  func.func @transform_1(%arg0: i32, %arg1: i32) -> (i32, i32) {
    %c0_i32 = arith.constant 0 : i32
    %c0_i32_0 = arith.constant 0 : i32
    return %arg1, %c0_i32 : i32, i32
  }
  func.func @transform_2(%arg0: i32, %arg1: i32) -> (i32, i32) {
    %c0_i32 = arith.constant 0 : i32
    %c0_i32_0 = arith.constant 0 : i32
    %c0_i32_1 = arith.constant 0 : i32
    return %c0_i32, %c0_i32_0 : i32, i32
  }
  func.func @transform_3(%arg0: i32, %arg1: i32) -> (i32, i32) {
    %c0_i32 = arith.constant 0 : i32
    %c0_i32_0 = arith.constant 0 : i32
    return %arg0, %c0_i32 : i32, i32
  }
}

</mosaic_0001>

<llo_original>
// kernel: tpu_custom_call.1
$region0: #{tpu_custom_call.1}
  #allocation0 [shape = 'u32[]', space=smem, size = 0x4, offset = 0x4, fixed_abs, tag = 'smem constant byte address 0x4 - core index']
  #allocation1 [shape = 'u32[144,128]{1,0:T(1,128)}', space=vmem, size = 0x12000, scoped, tag = 'internal scratch']
  %s0 = inlined_call_operand.hbm [shape: bf16[10240,128], index: 0, kind: input, shape index: {}]
  %s1 = inlined_call_operand.hbm [shape: bf16[128,128], index: 1, kind: input, shape index: {}]
  %s2 = inlined_call_operand.hbm [shape: f32[1,128], index: 2, kind: input, shape index: {}]
  %s3 = inlined_call_operand.hbm [shape: f32[10240,128], index: 3, kind: output, shape index: {}]
  %s4 = sld [smem:[#allocation0]]
  $region65: #{tpu_custom_call.1} parent=0
    _
  %s6 = ssub.s32 1, %s4
  %s7 = scalar_select 0, %s6, %s4
  $region1: #{tpu_custom_call.1} parent=0
    #allocation2 [shape = 'u8[262144]{0}', space=vmem, size = 0x40000, scoped, tag = 'input window, operand 0']
    #allocation3 [shape = 's32[2]{0}', space=sflag, size = 0x8, scoped, tag = 'scoped memory for tpu_custom_call.1']
    #allocation4 [shape = 's32[2]{0}', space=sflag, size = 0x8, scoped, tag = 'scoped memory for tpu_custom_call.1']
    #allocation5 [shape = 'u8[32768]{0}', space=vmem, size = 0x8000, scoped, tag = 'input window, operand 1, single buffered']
    #allocation6 [shape = 's32[1]{0}', space=sflag, size = 0x4, scoped, tag = 'scoped memory for tpu_custom_call.1']
    #allocation7 [shape = 'u8[512]{0}', space=vmem, size = 0x400, scoped, tag = 'input window, operand 2, single buffered']
    #allocation8 [shape = 'u8[524288]{0}', space=vmem, size = 0x80000, scoped, tag = 'output window, operand 0']
    %8 = vsyncpa [#allocation3], 0
    %s9 = scalar_lea.sflag [#allocation3], 1
    %10 = vsyncpa %s9, 0
    %11 = vsyncpa [#allocation6], 0
    %12 = vsyncpa [#allocation4], 0
    %s13 = scalar_lea.sflag [#allocation4], 1
    %14 = vsyncpa %s13, 0
    loop: start=0, step=1, limit=22
    $region2: #{tpu_custom_call.1} parent=1 // loop_pre_header
      _
    $region3: #{tpu_custom_call.1} parent=1 // loop_header
      %s16 = sphi 0, %s20
      %p17 = scmp.ge.s32.totalorder %s16, 22
      %s23 = sphi 0, %s35
      %s24 = sphi 0, %s31
      %s25 = sphi 0, %s23
      %s26 = sphi 0, %s24
      %s27 = sphi 0, %s25
      %s28 = sphi 0, %s26
      %s40 = sphi 0, %s42
      %s43 = sphi 0, %s40
      %s44 = sphi 0, %s43
      %s60 = sphi 0, %s44
      %s66 = sphi 0, %s68
      %s69 = sphi 0, %s66
      %s70 = sphi 0, %s69
      %s86 = sphi 0, %s70
      %s90 = sphi 0, %s90
      %s92 = sphi 0, %s90
      %s93 = sphi 0, %s92
      %s107 = sphi 0, %s93
      %s113 = sphi 0, %s115
      %s116 = sphi 0, %s113
      %s117 = sphi 0, %s116
      %s133 = sphi 0, %s117
    $region4: #{tpu_custom_call.1} parent=1 // loop_header_branch
      %19 = sbr.rel (%p17) target = $region8
    $region5: #{tpu_custom_call.1} parent=1 // loop_body
      %s21 = ssub.s32 %s16, 1
      %s22 = ssub.s32 %s16, 2
      %s29 = sadd.s32 1, %s24
      %p30 = scmp.ge.s32.totalorder %s29, 1
      %s31 = scalar_select %p30, 0, %s29
      %s32 = sadd.s32 1, %s23
      %s33 = scalar_select %p30, %s32, %s23
      %p34 = scmp.ge.s32.totalorder %s33, 20
      %s35 = scalar_select %p34, 0, %s33
      %s36 = ssub.s32 %s23, %s35
      %s37 = ssub.s32 %s24, %s31
      %s38 = sor.u32 %s36, %s37
      %p39 = scmp.eq.s32.totalorder %s38, 0
      %s41 = sadd.s32 %s40, 1
      %s42 = scalar_select %p39, %s40, %s41
      %p45 = pneg %p39
      %p46 = scmp.eq.s32.totalorder %s16, 19
      %p47 = por %p45, %p46
      %p48 = scmp.ne.s32.totalorder %s40, %s43
      %p49 = scmp.eq.s32.totalorder %s16, 0
      %p50 = por %p48, %p49
      %p51 = scmp.ne.s32.totalorder %s40, %s43
      %p52 = scmp.eq.s32.totalorder %s21, 19
      %p53 = por %p51, %p52
      %p54 = scmp.ne.s32.totalorder %s43, %s44
      %p55 = scmp.eq.s32.totalorder %s21, 0
      %p56 = por %p54, %p55
      %p57 = scmp.ne.s32.totalorder %s43, %s44
      %p58 = scmp.eq.s32.totalorder %s22, 19
      %p59 = por %p57, %p58
      %p61 = scmp.ne.s32.totalorder %s44, %s60
      %p62 = scmp.eq.s32.totalorder %s22, 0
      %p63 = por %p61, %p62
      %s64 = ssub.s32 %s24, %s31
      %p65 = scmp.eq.s32.totalorder %s64, 0
      %s67 = sadd.s32 %s66, 1
      %s68 = scalar_select %p65, %s66, %s67
      %p71 = pneg %p65
      %p72 = scmp.eq.s32.totalorder %s16, 19
      %p73 = por %p71, %p72
      %p74 = scmp.ne.s32.totalorder %s66, %s69
      %p75 = scmp.eq.s32.totalorder %s16, 0
      %p76 = por %p74, %p75
      %p77 = scmp.ne.s32.totalorder %s66, %s69
      %p78 = scmp.eq.s32.totalorder %s21, 19
      %p79 = por %p77, %p78
      %p80 = scmp.ne.s32.totalorder %s69, %s70
      %p81 = scmp.eq.s32.totalorder %s21, 0
      %p82 = por %p80, %p81
      %p83 = scmp.ne.s32.totalorder %s69, %s70
      %p84 = scmp.eq.s32.totalorder %s22, 19
      %p85 = por %p83, %p84
      %p87 = scmp.ne.s32.totalorder %s70, %s86
      %p88 = scmp.eq.s32.totalorder %s22, 0
      %p89 = por %p87, %p88
      %s91 = sadd.s32 %s90, 1
      %p94 = scmp.eq.s32.totalorder %s16, 19
      %p95 = scmp.ne.s32.totalorder %s90, %s92
      %p96 = scmp.eq.s32.totalorder %s16, 0
      %p97 = por %p95, %p96
      %p98 = scmp.ne.s32.totalorder %s90, %s92
      %p99 = scmp.eq.s32.totalorder %s21, 19
      %p100 = por %p98, %p99
      %p101 = scmp.ne.s32.totalorder %s92, %s93
      %p102 = scmp.eq.s32.totalorder %s21, 0
      %p103 = por %p101, %p102
      %p104 = scmp.ne.s32.totalorder %s92, %s93
      %p105 = scmp.eq.s32.totalorder %s22, 19
      %p106 = por %p104, %p105
      %p108 = scmp.ne.s32.totalorder %s93, %s107
      %p109 = scmp.eq.s32.totalorder %s22, 0
      %p110 = por %p108, %p109
      %s111 = ssub.s32 %s23, %s35
      %p112 = scmp.eq.s32.totalorder %s111, 0
      %s114 = sadd.s32 %s113, 1
      %s115 = scalar_select %p112, %s113, %s114
      %p118 = pneg %p112
      %p119 = scmp.eq.s32.totalorder %s16, 19
      %p120 = por %p118, %p119
      %p121 = scmp.ne.s32.totalorder %s113, %s116
      %p122 = scmp.eq.s32.totalorder %s16, 0
      %p123 = por %p121, %p122
      %p124 = scmp.ne.s32.totalorder %s113, %s116
      %p125 = scmp.eq.s32.totalorder %s21, 19
      %p126 = por %p124, %p125
      %p127 = scmp.ne.s32.totalorder %s116, %s117
      %p128 = scmp.eq.s32.totalorder %s21, 0
      %p129 = por %p127, %p128
      %p130 = scmp.ne.s32.totalorder %s116, %s117
      %p131 = scmp.eq.s32.totalorder %s22, 19
      %p132 = por %p130, %p131
      %p134 = scmp.ne.s32.totalorder %s117, %s133
      %p135 = scmp.eq.s32.totalorder %s22, 0
      %p136 = por %p134, %p135
      %p137 = scmp.le.s32.totalorder 1, %s16
      %p138 = scmp.lt.s32.totalorder %s16, 21
      %p139 = pnand %p137, %p138
      %p140 = pneg %p139
      // Predicated region
      $region9: #{tpu_custom_call.1} parent=5 // pred_check
        _
      $region10: #{tpu_custom_call.1} parent=5 // pred_check_branch
        %142 = sbr.rel (%p139) target = $region12
      $region11: #{tpu_custom_call.1} parent=5 // pred_region
        %s143 = ssub.s32 %s16, 1
        // Predicated region
        $region13: #{tpu_custom_call.1} parent=11 // pred_check
          %p144 = pneg %p82
        $region14: #{tpu_custom_call.1} parent=11 // pred_check_branch
          %146 = sbr.rel (%p144) target = $region16
        $region15: #{tpu_custom_call.1} parent=11 // pred_region
          %s147 = smul.u32 16, %s26
          %s149 = ssub.s32 1024, 1024
          %150 = vsyncadd [#allocation6], %s149
          %s151 = smul.addr %s147, 64
          %s152 = scalar_lea.hbm %s1, %s151
          %s153 = sshll.u32 [#allocation5], 4
          %s154 = int_to_ptr.vmem [resolvable:$true] %s153
          %159 = dma.hbm_to_vmem [thread:$0]  %s152, 1024, %s154, [#allocation6], 64, 64, 4
        $region16: #{tpu_custom_call.1} parent=11 // pred_fallthru
          _
        // Predicated region
        $region17: #{tpu_custom_call.1} parent=11 // pred_check
          %p160 = pneg %p103
        $region18: #{tpu_custom_call.1} parent=11 // pred_check_branch
          %162 = sbr.rel (%p160) target = $region20
        $region19: #{tpu_custom_call.1} parent=11 // pred_region
          %s164 = ssub.s32 16, 16
          %165 = vsyncadd [#allocation6], %s164
          %s167 = sshll.u32 [#allocation7], 4
          %s168 = int_to_ptr.vmem [resolvable:$true] %s167
          %170 = dma.hbm_to_vmem [thread:$0]  %s2, 16, %s168, [#allocation6]
        $region20: #{tpu_custom_call.1} parent=11 // pred_fallthru
          _
      $region12: #{tpu_custom_call.1} parent=5 // pred_fallthru
        _
      %p171 = scmp.lt.s32.totalorder %s16, 20
      // Predicated region
      $region21: #{tpu_custom_call.1} parent=5 // pred_check
        %p172 = pneg %p171
      $region22: #{tpu_custom_call.1} parent=5 // pred_check_branch
        %174 = sbr.rel (%p172) target = $region24
      $region23: #{tpu_custom_call.1} parent=5 // pred_region
        // Predicated region
        $region25: #{tpu_custom_call.1} parent=23 // pred_check
          %p175 = pneg %p50
        $region26: #{tpu_custom_call.1} parent=23 // pred_check_branch
          %177 = sbr.rel (%p175) target = $region28
        $region27: #{tpu_custom_call.1} parent=23 // pred_region
          %s178 = sand.u32 %s40, 1
          %s179 = scalar_lea.sflag [#allocation3], %s178
          %s180 = sand.u32 %s40, 1
          %s181 = smul.addr %s180, 256
          %s182 = scalar_lea.vmem [#allocation2], %s181
          %s183 = smul.u32 64, %s23
          %s185 = ssub.s32 4096, 4096
          %186 = vsyncadd %s179, %s185
          %s187 = sadd.s32 %s24, %s183
          %s188 = smul.addr %s187, 64
          %s189 = scalar_lea.hbm %s0, %s188
          %s190 = sshll.u32 %s182, 4
          %s191 = int_to_ptr.vmem [resolvable:$true] %s190
          %196 = dma.hbm_to_vmem [thread:$0]  %s189, 4096, %s191, %s179, 64, 64, 4
        $region28: #{tpu_custom_call.1} parent=23 // pred_fallthru
          _
      $region24: #{tpu_custom_call.1} parent=5 // pred_fallthru
        _
      %p197 = scmp.le.s32.totalorder 1, %s16
      %p198 = scmp.lt.s32.totalorder %s16, 21
      %p199 = pnand %p197, %p198
      %p200 = pneg %p199
      // Predicated region
      $region29: #{tpu_custom_call.1} parent=5 // pred_check
        _
      $region30: #{tpu_custom_call.1} parent=5 // pred_check_branch
        %202 = sbr.rel (%p199) target = $region32
      $region31: #{tpu_custom_call.1} parent=5 // pred_region
        %s203 = ssub.s32 %s16, 1
        %s204 = sand.u32 %s43, 1
        %s205 = scalar_lea.sflag [#allocation3], %s204
        %s206 = sand.u32 %s43, 1
        %s207 = smul.addr %s206, 256
        %s208 = scalar_lea.vmem [#allocation2], %s207
        // Predicated region
        $region33: #{tpu_custom_call.1} parent=31 // pred_check
          %p209 = pneg %p56
        $region34: #{tpu_custom_call.1} parent=31 // pred_check_branch
          %211 = sbr.rel (%p209) target = $region36
        $region35: #{tpu_custom_call.1} parent=31 // pred_region
          %212 = dma.done %s205, 4096
        $region36: #{tpu_custom_call.1} parent=31 // pred_fallthru
          _
        // Predicated region
        $region37: #{tpu_custom_call.1} parent=31 // pred_check
          %p213 = pneg %p82
        $region38: #{tpu_custom_call.1} parent=31 // pred_check_branch
          %215 = sbr.rel (%p213) target = $region40
        $region39: #{tpu_custom_call.1} parent=31 // pred_region
          %216 = dma.done [#allocation6], 1024
        $region40: #{tpu_custom_call.1} parent=31 // pred_fallthru
          _
        // Predicated region
        $region41: #{tpu_custom_call.1} parent=31 // pred_check
          %p217 = pneg %p103
        $region42: #{tpu_custom_call.1} parent=31 // pred_check_branch
          %219 = sbr.rel (%p217) target = $region44
        $region43: #{tpu_custom_call.1} parent=31 // pred_region
          %220 = dma.done [#allocation6], 16
        $region44: #{tpu_custom_call.1} parent=31 // pred_fallthru
          _
        %s221 = sand.u32 %s43, 1
        %s222 = scalar_lea.sflag [#allocation3], %s221
        %s223 = sand.u32 %s43, 1
        %s224 = smul.addr %s223, 256
        %s225 = scalar_lea.vmem [#allocation2], %s224
        %p226 = pneg %p56
        %p227 = pneg %p53
        %p228 = pneg %p82
        %p229 = pneg %p79
        %p230 = pneg %p103
        %p231 = pneg %p100
        %p232 = pneg %p129
        %p233 = pneg %p126
        %s234 = sand.u32 %s116, 1
        %s235 = scalar_lea.sflag [#allocation4], %s234
        %s236 = sand.u32 %s116, 1
        %s237 = smul.addr %s236, 512
        %s238 = scalar_lea.vmem [#allocation8], %s237
        %s239 = smul.u32 64, %s25
        %s240 = smul.u32 16, %s26
        %s241 = smul.u32 64, %s25
        %p243 = scmp.eq.s32.totalorder %s26, 0
        // Predicated region
        $region45: #{tpu_custom_call.1} parent=31 // pred_check
          %p244 = pneg %p243
        $region46: #{tpu_custom_call.1} parent=31 // pred_check_branch
          %246 = sbr.rel (%p244) target = $region48
        $region47: #{tpu_custom_call.1} parent=31 // pred_region
          %247 = vst [vmem:[%s238] sm:$0xff] 0.0
          %248 = vst [vmem:[%s238 + $0x8] sm:$0xff] 0.0
          %249 = vst [vmem:[%s238 + $0x10] sm:$0xff] 0.0
          %250 = vst [vmem:[%s238 + $0x18] sm:$0xff] 0.0
          %251 = vst [vmem:[%s238 + $0x20] sm:$0xff] 0.0
          %252 = vst [vmem:[%s238 + $0x28] sm:$0xff] 0.0
          %253 = vst [vmem:[%s238 + $0x30] sm:$0xff] 0.0
          %254 = vst [vmem:[%s238 + $0x38] sm:$0xff] 0.0
          %255 = vst [vmem:[%s238 + $0x40] sm:$0xff] 0.0
          %256 = vst [vmem:[%s238 + $0x48] sm:$0xff] 0.0
          %257 = vst [vmem:[%s238 + $0x50] sm:$0xff] 0.0
          %258 = vst [vmem:[%s238 + $0x58] sm:$0xff] 0.0
          %259 = vst [vmem:[%s238 + $0x60] sm:$0xff] 0.0
          %260 = vst [vmem:[%s238 + $0x68] sm:$0xff] 0.0
          %261 = vst [vmem:[%s238 + $0x70] sm:$0xff] 0.0
          %262 = vst [vmem:[%s238 + $0x78] sm:$0xff] 0.0
          %263 = vst [vmem:[%s238 + $0x80] sm:$0xff] 0.0
          %264 = vst [vmem:[%s238 + $0x88] sm:$0xff] 0.0
          %265 = vst [vmem:[%s238 + $0x90] sm:$0xff] 0.0
          %266 = vst [vmem:[%s238 + $0x98] sm:$0xff] 0.0
          %267 = vst [vmem:[%s238 + $0xa0] sm:$0xff] 0.0
          %268 = vst [vmem:[%s238 + $0xa8] sm:$0xff] 0.0
          %269 = vst [vmem:[%s238 + $0xb0] sm:$0xff] 0.0
          %270 = vst [vmem:[%s238 + $0xb8] sm:$0xff] 0.0
          %271 = vst [vmem:[%s238 + $0xc0] sm:$0xff] 0.0
          %272 = vst [vmem:[%s238 + $0xc8] sm:$0xff] 0.0
          %273 = vst [vmem:[%s238 + $0xd0] sm:$0xff] 0.0
          %274 = vst [vmem:[%s238 + $0xd8] sm:$0xff] 0.0
          %275 = vst [vmem:[%s238 + $0xe0] sm:$0xff] 0.0
          %276 = vst [vmem:[%s238 + $0xe8] sm:$0xff] 0.0
          %277 = vst [vmem:[%s238 + $0xf0] sm:$0xff] 0.0
          %278 = vst [vmem:[%s238 + $0xf8] sm:$0xff] 0.0
          %279 = vst [vmem:[%s238 + $0x100] sm:$0xff] 0.0
          %280 = vst [vmem:[%s238 + $0x108] sm:$0xff] 0.0
          %281 = vst [vmem:[%s238 + $0x110] sm:$0xff] 0.0
          %282 = vst [vmem:[%s238 + $0x118] sm:$0xff] 0.0
          %283 = vst [vmem:[%s238 + $0x120] sm:$0xff] 0.0
          %284 = vst [vmem:[%s238 + $0x128] sm:$0xff] 0.0
          %285 = vst [vmem:[%s238 + $0x130] sm:$0xff] 0.0
          %286 = vst [vmem:[%s238 + $0x138] sm:$0xff] 0.0
          %287 = vst [vmem:[%s238 + $0x140] sm:$0xff] 0.0
          %288 = vst [vmem:[%s238 + $0x148] sm:$0xff] 0.0
          %289 = vst [vmem:[%s238 + $0x150] sm:$0xff] 0.0
          %290 = vst [vmem:[%s238 + $0x158] sm:$0xff] 0.0
          %291 = vst [vmem:[%s238 + $0x160] sm:$0xff] 0.0
          %292 = vst [vmem:[%s238 + $0x168] sm:$0xff] 0.0
          %293 = vst [vmem:[%s238 + $0x170] sm:$0xff] 0.0
          %294 = vst [vmem:[%s238 + $0x178] sm:$0xff] 0.0
          %295 = vst [vmem:[%s238 + $0x180] sm:$0xff] 0.0
          %296 = vst [vmem:[%s238 + $0x188] sm:$0xff] 0.0
          %297 = vst [vmem:[%s238 + $0x190] sm:$0xff] 0.0
          %298 = vst [vmem:[%s238 + $0x198] sm:$0xff] 0.0
          %299 = vst [vmem:[%s238 + $0x1a0] sm:$0xff] 0.0
          %300 = vst [vmem:[%s238 + $0x1a8] sm:$0xff] 0.0
          %301 = vst [vmem:[%s238 + $0x1b0] sm:$0xff] 0.0
          %302 = vst [vmem:[%s238 + $0x1b8] sm:$0xff] 0.0
          %303 = vst [vmem:[%s238 + $0x1c0] sm:$0xff] 0.0
          %304 = vst [vmem:[%s238 + $0x1c8] sm:$0xff] 0.0
          %305 = vst [vmem:[%s238 + $0x1d0] sm:$0xff] 0.0
          %306 = vst [vmem:[%s238 + $0x1d8] sm:$0xff] 0.0
          %307 = vst [vmem:[%s238 + $0x1e0] sm:$0xff] 0.0
          %308 = vst [vmem:[%s238 + $0x1e8] sm:$0xff] 0.0
          %309 = vst [vmem:[%s238 + $0x1f0] sm:$0xff] 0.0
          %310 = vst [vmem:[%s238 + $0x1f8] sm:$0xff] 0.0
        $region48: #{tpu_custom_call.1} parent=31 // pred_fallthru
          _
        %v311 = vld [vmem:[%s238] sm:$0xff]
        %v312 = vld [vmem:[%s238 + $0x8] sm:$0xff]
        %v313 = vld [vmem:[%s238 + $0x10] sm:$0xff]
        %v314 = vld [vmem:[%s238 + $0x18] sm:$0xff]
        %v315 = vld [vmem:[%s238 + $0x20] sm:$0xff]
        %v316 = vld [vmem:[%s238 + $0x28] sm:$0xff]
        %v317 = vld [vmem:[%s238 + $0x30] sm:$0xff]
        %v318 = vld [vmem:[%s238 + $0x38] sm:$0xff]
        %v319 = vld [vmem:[%s238 + $0x40] sm:$0xff]
        %v320 = vld [vmem:[%s238 + $0x48] sm:$0xff]
        %v321 = vld [vmem:[%s238 + $0x50] sm:$0xff]
        %v322 = vld [vmem:[%s238 + $0x58] sm:$0xff]
        %v323 = vld [vmem:[%s238 + $0x60] sm:$0xff]
        %v324 = vld [vmem:[%s238 + $0x68] sm:$0xff]
        %v325 = vld [vmem:[%s238 + $0x70] sm:$0xff]
        %v326 = vld [vmem:[%s238 + $0x78] sm:$0xff]
        %v327 = vld [vmem:[%s238 + $0x80] sm:$0xff]
        %v328 = vld [vmem:[%s238 + $0x88] sm:$0xff]
        %v329 = vld [vmem:[%s238 + $0x90] sm:$0xff]
        %v330 = vld [vmem:[%s238 + $0x98] sm:$0xff]
        %v331 = vld [vmem:[%s238 + $0xa0] sm:$0xff]
        %v332 = vld [vmem:[%s238 + $0xa8] sm:$0xff]
        %v333 = vld [vmem:[%s238 + $0xb0] sm:$0xff]
        %v334 = vld [vmem:[%s238 + $0xb8] sm:$0xff]
        %v335 = vld [vmem:[%s238 + $0xc0] sm:$0xff]
        %v336 = vld [vmem:[%s238 + $0xc8] sm:$0xff]
        %v337 = vld [vmem:[%s238 + $0xd0] sm:$0xff]
        %v338 = vld [vmem:[%s238 + $0xd8] sm:$0xff]
        %v339 = vld [vmem:[%s238 + $0xe0] sm:$0xff]
        %v340 = vld [vmem:[%s238 + $0xe8] sm:$0xff]
        %v341 = vld [vmem:[%s238 + $0xf0] sm:$0xff]
        %v342 = vld [vmem:[%s238 + $0xf8] sm:$0xff]
        %v343 = vld [vmem:[%s238 + $0x100] sm:$0xff]
        %v344 = vld [vmem:[%s238 + $0x108] sm:$0xff]
        %v345 = vld [vmem:[%s238 + $0x110] sm:$0xff]
        %v346 = vld [vmem:[%s238 + $0x118] sm:$0xff]
        %v347 = vld [vmem:[%s238 + $0x120] sm:$0xff]
        %v348 = vld [vmem:[%s238 + $0x128] sm:$0xff]
        %v349 = vld [vmem:[%s238 + $0x130] sm:$0xff]
        %v350 = vld [vmem:[%s238 + $0x138] sm:$0xff]
        %v351 = vld [vmem:[%s238 + $0x140] sm:$0xff]
        %v352 = vld [vmem:[%s238 + $0x148] sm:$0xff]
        %v353 = vld [vmem:[%s238 + $0x150] sm:$0xff]
        %v354 = vld [vmem:[%s238 + $0x158] sm:$0xff]
        %v355 = vld [vmem:[%s238 + $0x160] sm:$0xff]
        %v356 = vld [vmem:[%s238 + $0x168] sm:$0xff]
        %v357 = vld [vmem:[%s238 + $0x170] sm:$0xff]
        %v358 = vld [vmem:[%s238 + $0x178] sm:$0xff]
        %v359 = vld [vmem:[%s238 + $0x180] sm:$0xff]
        %v360 = vld [vmem:[%s238 + $0x188] sm:$0xff]
        %v361 = vld [vmem:[%s238 + $0x190] sm:$0xff]
        %v362 = vld [vmem:[%s238 + $0x198] sm:$0xff]
        %v363 = vld [vmem:[%s238 + $0x1a0] sm:$0xff]
        %v364 = vld [vmem:[%s238 + $0x1a8] sm:$0xff]
        %v365 = vld [vmem:[%s238 + $0x1b0] sm:$0xff]
        %v366 = vld [vmem:[%s238 + $0x1b8] sm:$0xff]
        %v367 = vld [vmem:[%s238 + $0x1c0] sm:$0xff]
        %v368 = vld [vmem:[%s238 + $0x1c8] sm:$0xff]
        %v369 = vld [vmem:[%s238 + $0x1d0] sm:$0xff]
        %v370 = vld [vmem:[%s238 + $0x1d8] sm:$0xff]
        %v371 = vld [vmem:[%s238 + $0x1e0] sm:$0xff]
        %v372 = vld [vmem:[%s238 + $0x1e8] sm:$0xff]
        %v373 = vld [vmem:[%s238 + $0x1f0] sm:$0xff]
        %v374 = vld [vmem:[%s238 + $0x1f8] sm:$0xff]
        %v375 = vld [vmem:[%s208] sm:$0xf]
        %v376 = vld [vmem:[%s208 + $0x4] sm:$0xf]
        %v377 = vld [vmem:[%s208 + $0x8] sm:$0xf]
        %v378 = vld [vmem:[%s208 + $0xc] sm:$0xf]
        %v379 = vld [vmem:[%s208 + $0x10] sm:$0xf]
        %v380 = vld [vmem:[%s208 + $0x14] sm:$0xf]
        %v381 = vld [vmem:[%s208 + $0x18] sm:$0xf]
        %v382 = vld [vmem:[%s208 + $0x1c] sm:$0xf]
        %v383 = vld [vmem:[%s208 + $0x20] sm:$0xf]
        %v384 = vld [vmem:[%s208 + $0x24] sm:$0xf]
        %v385 = vld [vmem:[%s208 + $0x28] sm:$0xf]
        %v386 = vld [vmem:[%s208 + $0x2c] sm:$0xf]
        %v387 = vld [vmem:[%s208 + $0x30] sm:$0xf]
        %v388 = vld [vmem:[%s208 + $0x34] sm:$0xf]
        %v389 = vld [vmem:[%s208 + $0x38] sm:$0xf]
        %v390 = vld [vmem:[%s208 + $0x3c] sm:$0xf]
        %v391 = vld [vmem:[%s208 + $0x40] sm:$0xf]
        %v392 = vld [vmem:[%s208 + $0x44] sm:$0xf]
        %v393 = vld [vmem:[%s208 + $0x48] sm:$0xf]
        %v394 = vld [vmem:[%s208 + $0x4c] sm:$0xf]
        %v395 = vld [vmem:[%s208 + $0x50] sm:$0xf]
        %v396 = vld [vmem:[%s208 + $0x54] sm:$0xf]
        %v397 = vld [vmem:[%s208 + $0x58] sm:$0xf]
        %v398 = vld [vmem:[%s208 + $0x5c] sm:$0xf]
        %v399 = vld [vmem:[%s208 + $0x60] sm:$0xf]
        %v400 = vld [vmem:[%s208 + $0x64] sm:$0xf]
        %v401 = vld [vmem:[%s208 + $0x68] sm:$0xf]
        %v402 = vld [vmem:[%s208 + $0x6c] sm:$0xf]
        %v403 = vld [vmem:[%s208 + $0x70] sm:$0xf]
        %v404 = vld [vmem:[%s208 + $0x74] sm:$0xf]
        %v405 = vld [vmem:[%s208 + $0x78] sm:$0xf]
        %v406 = vld [vmem:[%s208 + $0x7c] sm:$0xf]
        %v407 = vld [vmem:[%s208 + $0x80] sm:$0xf]
        %v408 = vld [vmem:[%s208 + $0x84] sm:$0xf]
        %v409 = vld [vmem:[%s208 + $0x88] sm:$0xf]
        %v410 = vld [vmem:[%s208 + $0x8c] sm:$0xf]
        %v411 = vld [vmem:[%s208 + $0x90] sm:$0xf]
        %v412 = vld [vmem:[%s208 + $0x94] sm:$0xf]
        %v413 = vld [vmem:[%s208 + $0x98] sm:$0xf]
        %v414 = vld [vmem:[%s208 + $0x9c] sm:$0xf]
        %v415 = vld [vmem:[%s208 + $0xa0] sm:$0xf]
        %v416 = vld [vmem:[%s208 + $0xa4] sm:$0xf]
        %v417 = vld [vmem:[%s208 + $0xa8] sm:$0xf]
        %v418 = vld [vmem:[%s208 + $0xac] sm:$0xf]
        %v419 = vld [vmem:[%s208 + $0xb0] sm:$0xf]
        %v420 = vld [vmem:[%s208 + $0xb4] sm:$0xf]
        %v421 = vld [vmem:[%s208 + $0xb8] sm:$0xf]
        %v422 = vld [vmem:[%s208 + $0xbc] sm:$0xf]
        %v423 = vld [vmem:[%s208 + $0xc0] sm:$0xf]
        %v424 = vld [vmem:[%s208 + $0xc4] sm:$0xf]
        %v425 = vld [vmem:[%s208 + $0xc8] sm:$0xf]
        %v426 = vld [vmem:[%s208 + $0xcc] sm:$0xf]
        %v427 = vld [vmem:[%s208 + $0xd0] sm:$0xf]
        %v428 = vld [vmem:[%s208 + $0xd4] sm:$0xf]
        %v429 = vld [vmem:[%s208 + $0xd8] sm:$0xf]
        %v430 = vld [vmem:[%s208 + $0xdc] sm:$0xf]
        %v431 = vld [vmem:[%s208 + $0xe0] sm:$0xf]
        %v432 = vld [vmem:[%s208 + $0xe4] sm:$0xf]
        %v433 = vld [vmem:[%s208 + $0xe8] sm:$0xf]
        %v434 = vld [vmem:[%s208 + $0xec] sm:$0xf]
        %v435 = vld [vmem:[%s208 + $0xf0] sm:$0xf]
        %v436 = vld [vmem:[%s208 + $0xf4] sm:$0xf]
        %v437 = vld [vmem:[%s208 + $0xf8] sm:$0xf]
        %v438 = vld [vmem:[%s208 + $0xfc] sm:$0xf]
        %v439 = vld [vmem:[#allocation5] sm:$0xf]
        %v440 = vld [vmem:[#allocation5 + $0x4] sm:$0xf]
        %v441 = vld [vmem:[#allocation5 + $0x8] sm:$0xf]
        %v442 = vld [vmem:[#allocation5 + $0xc] sm:$0xf]
        %v443 = vld [vmem:[#allocation5 + $0x10] sm:$0xf]
        %v444 = vld [vmem:[#allocation5 + $0x14] sm:$0xf]
        %v445 = vld [vmem:[#allocation5 + $0x18] sm:$0xf]
        %v446 = vld [vmem:[#allocation5 + $0x1c] sm:$0xf]
        %v447 = vld [vmem:[#allocation5 + $0x20] sm:$0xf]
        %v448 = vld [vmem:[#allocation5 + $0x24] sm:$0xf]
        %v449 = vld [vmem:[#allocation5 + $0x28] sm:$0xf]
        %v450 = vld [vmem:[#allocation5 + $0x2c] sm:$0xf]
        %v451 = vld [vmem:[#allocation5 + $0x30] sm:$0xf]
        %v452 = vld [vmem:[#allocation5 + $0x34] sm:$0xf]
        %v453 = vld [vmem:[#allocation5 + $0x38] sm:$0xf]
        %v454 = vld [vmem:[#allocation5 + $0x3c] sm:$0xf]
        %v519 = vunpack.c.l.b16 %v375
        %v520 = vunpack.c.l.b16 %v376
        %v521 = vunpack.c.l.b16 %v377
        %v522 = vunpack.c.l.b16 %v378
        %v523 = vunpack.c.l.b16 %v379
        %v524 = vunpack.c.l.b16 %v380
        %v525 = vunpack.c.l.b16 %v381
        %v526 = vunpack.c.l.b16 %v382
        %v527 = vunpack.c.l.b16 %v383
        %v528 = vunpack.c.l.b16 %v384
        %v529 = vunpack.c.l.b16 %v385
        %v530 = vunpack.c.l.b16 %v386
        %v531 = vunpack.c.l.b16 %v387
        %v532 = vunpack.c.l.b16 %v388
        %v533 = vunpack.c.l.b16 %v389
        %v534 = vunpack.c.l.b16 %v390
        %v535 = vunpack.c.l.b16 %v391
        %v536 = vunpack.c.l.b16 %v392
        %v537 = vunpack.c.l.b16 %v393
        %v538 = vunpack.c.l.b16 %v394
        %v539 = vunpack.c.l.b16 %v395
        %v540 = vunpack.c.l.b16 %v396
        %v541 = vunpack.c.l.b16 %v397
        %v542 = vunpack.c.l.b16 %v398
        %v543 = vunpack.c.l.b16 %v399
        %v544 = vunpack.c.l.b16 %v400
        %v545 = vunpack.c.l.b16 %v401
        %v546 = vunpack.c.l.b16 %v402
        %v547 = vunpack.c.l.b16 %v403
        %v548 = vunpack.c.l.b16 %v404
        %v549 = vunpack.c.l.b16 %v405
        %v550 = vunpack.c.l.b16 %v406
        %v551 = vunpack.c.l.b16 %v407
        %v552 = vunpack.c.l.b16 %v408
        %v553 = vunpack.c.l.b16 %v409
        %v554 = vunpack.c.l.b16 %v410
        %v555 = vunpack.c.l.b16 %v411
        %v556 = vunpack.c.l.b16 %v412
        %v557 = vunpack.c.l.b16 %v413
        %v558 = vunpack.c.l.b16 %v414
        %v559 = vunpack.c.l.b16 %v415
        %v560 = vunpack.c.l.b16 %v416
        %v561 = vunpack.c.l.b16 %v417
        %v562 = vunpack.c.l.b16 %v418
        %v563 = vunpack.c.l.b16 %v419
        %v564 = vunpack.c.l.b16 %v420
        %v565 = vunpack.c.l.b16 %v421
        %v566 = vunpack.c.l.b16 %v422
        %v567 = vunpack.c.l.b16 %v423
        %v568 = vunpack.c.l.b16 %v424
        %v569 = vunpack.c.l.b16 %v425
        %v570 = vunpack.c.l.b16 %v426
        %v571 = vunpack.c.l.b16 %v427
        %v572 = vunpack.c.l.b16 %v428
        %v573 = vunpack.c.l.b16 %v429
        %v574 = vunpack.c.l.b16 %v430
        %v575 = vunpack.c.l.b16 %v431
        %v576 = vunpack.c.l.b16 %v432
        %v577 = vunpack.c.l.b16 %v433
        %v578 = vunpack.c.l.b16 %v434
        %v579 = vunpack.c.l.b16 %v435
        %v580 = vunpack.c.l.b16 %v436
        %v581 = vunpack.c.l.b16 %v437
        %v582 = vunpack.c.l.b16 %v438
        %v583 = vpack.c.b16 %v520, %v519
        %v584 = vpack.c.b16 %v522, %v521
        %v585 = vpack.c.b16 %v524, %v523
        %v586 = vpack.c.b16 %v526, %v525
        %v587 = vpack.c.b16 %v528, %v527
        %v588 = vpack.c.b16 %v530, %v529
        %v589 = vpack.c.b16 %v532, %v531
        %v590 = vpack.c.b16 %v534, %v533
        %v591 = vpack.c.b16 %v536, %v535
        %v592 = vpack.c.b16 %v538, %v537
        %v593 = vpack.c.b16 %v540, %v539
        %v594 = vpack.c.b16 %v542, %v541
        %v595 = vpack.c.b16 %v544, %v543
        %v596 = vpack.c.b16 %v546, %v545
        %v597 = vpack.c.b16 %v548, %v547
        %v598 = vpack.c.b16 %v550, %v549
        %v599 = vpack.c.b16 %v552, %v551
        %v600 = vpack.c.b16 %v554, %v553
        %v601 = vpack.c.b16 %v556, %v555
        %v602 = vpack.c.b16 %v558, %v557
        %v603 = vpack.c.b16 %v560, %v559
        %v604 = vpack.c.b16 %v562, %v561
        %v605 = vpack.c.b16 %v564, %v563
        %v606 = vpack.c.b16 %v566, %v565
        %v607 = vpack.c.b16 %v568, %v567
        %v608 = vpack.c.b16 %v570, %v569
        %v609 = vpack.c.b16 %v572, %v571
        %v610 = vpack.c.b16 %v574, %v573
        %v611 = vpack.c.b16 %v576, %v575
        %v612 = vpack.c.b16 %v578, %v577
        %v613 = vpack.c.b16 %v580, %v579
        %v614 = vpack.c.b16 %v582, %v581
        %v663 = vunpack.c.l.b16 %v439
        %v664 = vunpack.c.l.b16 %v440
        %v665 = vunpack.c.l.b16 %v441
        %v666 = vunpack.c.l.b16 %v442
        %v667 = vunpack.c.l.b16 %v443
        %v668 = vunpack.c.l.b16 %v444
        %v669 = vunpack.c.l.b16 %v445
        %v670 = vunpack.c.l.b16 %v446
        %v671 = vunpack.c.l.b16 %v447
        %v672 = vunpack.c.l.b16 %v448
        %v673 = vunpack.c.l.b16 %v449
        %v674 = vunpack.c.l.b16 %v450
        %v675 = vunpack.c.l.b16 %v451
        %v676 = vunpack.c.l.b16 %v452
        %v677 = vunpack.c.l.b16 %v453
        %v678 = vunpack.c.l.b16 %v454
        %v679 = vpack.c.b16 %v664, %v663
        %v680 = vpack.c.b16 %v666, %v665
        %v681 = vpack.c.b16 %v668, %v667
        %v682 = vpack.c.b16 %v670, %v669
        %v683 = vpack.c.b16 %v672, %v671
        %v684 = vpack.c.b16 %v674, %v673
        %v685 = vpack.c.b16 %v676, %v675
        %v686 = vpack.c.b16 %v678, %v677
        %695 = vmatprep.subr.bf16.mxu0 0
        %696 = vmatpush1.bf16.msra.mxu0 %v679
        %697 = vmatprep.subr.bf16.mxu0 0
        %698 = vmatpush1.bf16.msra.mxu0 %v680
        %699 = vmatprep.subr.bf16.mxu0 0
        %700 = vmatpush1.bf16.msra.mxu0 %v681
        %701 = vmatprep.subr.bf16.mxu0 0
        %702 = vmatpush1.bf16.msra.mxu0 %v682
        %703 = vmatprep.subr.bf16.mxu0 0
        %704 = vmatpush1.bf16.msra.mxu0 %v683
        %705 = vmatprep.subr.bf16.mxu0 0
        %706 = vmatpush1.bf16.msra.mxu0 %v684
        %707 = vmatprep.subr.bf16.mxu0 0
        %708 = vmatpush1.bf16.msra.mxu0 %v685
        %709 = vmatprep.subr.bf16.mxu0 0
        %710 = vmatpush1.bf16.msra.mxu0 %v686
        %711 = vmatprep.subr.bf16.mxu0 0
        %712 = vmatpush1.bf16.msra.mxu0 0
        %713 = vmatprep.subr.bf16.mxu0 0
        %714 = vmatpush1.bf16.msra.mxu0 0
        %715 = vmatprep.subr.bf16.mxu0 0
        %716 = vmatpush1.bf16.msra.mxu0 0
        %717 = vmatprep.subr.bf16.mxu0 0
        %718 = vmatpush1.bf16.msra.mxu0 0
        %719 = vmatprep.subr.bf16.mxu0 0
        %720 = vmatpush1.bf16.msra.mxu0 0
        %721 = vmatprep.subr.bf16.mxu0 0
        %722 = vmatpush1.bf16.msra.mxu0 0
        %723 = vmatprep.subr.bf16.mxu0 0
        %724 = vmatpush1.bf16.msra.mxu0 0
        %725 = vmatprep.subr.bf16.mxu0 0
        %726 = vmatpush1.bf16.msra.mxu0 0
        %727 = vmatprep.mubr.bf16.mxu0 0
        %728 = vmatmul.mubr.bf16.gmra.mrb[0].mxu0 %v583
        %v729 = vpop.f32.mrb[0].mxu0
        %v730 = vadd.f32 0.0, %v729
        %v731 = vpop.f32.mrb[0].mxu0
        %v732 = vpop.f32.mrb[0].mxu0
        %v733 = vadd.f32 0.0, %v732
        %v734 = vpop.f32.mrb[0].mxu0
        %735 = vmatprep.mubr.bf16.mxu0 0
        %736 = vmatmul.mubr.bf16.gmra.mrb[0].mxu0 %v584
        %v737 = vpop.f32.mrb[0].mxu0
        %v738 = vadd.f32 0.0, %v737
        %v739 = vpop.f32.mrb[0].mxu0
        %v740 = vpop.f32.mrb[0].mxu0
        %v741 = vadd.f32 0.0, %v740
        %v742 = vpop.f32.mrb[0].mxu0
        %743 = vmatprep.mubr.bf16.mxu0 0
        %744 = vmatmul.mubr.bf16.gmra.mrb[0].mxu0 %v585
        %v745 = vpop.f32.mrb[0].mxu0
        %v746 = vadd.f32 0.0, %v745
        %v747 = vpop.f32.mrb[0].mxu0
        %v748 = vpop.f32.mrb[0].mxu0
        %v749 = vadd.f32 0.0, %v748
        %v750 = vpop.f32.mrb[0].mxu0
        %751 = vmatprep.mubr.bf16.mxu0 0
        %752 = vmatmul.mubr.bf16.gmra.mrb[0].mxu0 %v586
        %v753 = vpop.f32.mrb[0].mxu0
        %v754 = vadd.f32 0.0, %v753
        %v755 = vpop.f32.mrb[0].mxu0
        %v756 = vpop.f32.mrb[0].mxu0
        %v757 = vadd.f32 0.0, %v756
        %v758 = vpop.f32.mrb[0].mxu0
        %759 = vmatprep.mubr.bf16.mxu0 0
        %760 = vmatmul.mubr.bf16.gmra.mrb[0].mxu0 %v587
        %v761 = vpop.f32.mrb[0].mxu0
        %v762 = vadd.f32 0.0, %v761
        %v763 = vpop.f32.mrb[0].mxu0
        %v764 = vpop.f32.mrb[0].mxu0
        %v765 = vadd.f32 0.0, %v764
        %v766 = vpop.f32.mrb[0].mxu0
        %767 = vmatprep.mubr.bf16.mxu0 0
        %768 = vmatmul.mubr.bf16.gmra.mrb[0].mxu0 %v588
        %v769 = vpop.f32.mrb[0].mxu0
        %v770 = vadd.f32 0.0, %v769
        %v771 = vpop.f32.mrb[0].mxu0
        %v772 = vpop.f32.mrb[0].mxu0
        %v773 = vadd.f32 0.0, %v772
        %v774 = vpop.f32.mrb[0].mxu0
        %775 = vmatprep.mubr.bf16.mxu0 0
        %776 = vmatmul.mubr.bf16.gmra.mrb[0].mxu0 %v589
        %v777 = vpop.f32.mrb[0].mxu0
        %v778 = vadd.f32 0.0, %v777
        %v779 = vpop.f32.mrb[0].mxu0
        %v780 = vpop.f32.mrb[0].mxu0
        %v781 = vadd.f32 0.0, %v780
        %v782 = vpop.f32.mrb[0].mxu0
        %783 = vmatprep.mubr.bf16.mxu0 0
        %784 = vmatmul.mubr.bf16.gmra.mrb[0].mxu0 %v590
        %v785 = vpop.f32.mrb[0].mxu0
        %v786 = vadd.f32 0.0, %v785
        %v787 = vpop.f32.mrb[0].mxu0
        %v788 = vpop.f32.mrb[0].mxu0
        %v789 = vadd.f32 0.0, %v788
        %v790 = vpop.f32.mrb[0].mxu0
        %791 = vmatprep.mubr.bf16.mxu0 0
        %792 = vmatmul.mubr.bf16.gmra.mrb[0].mxu0 %v591
        %v793 = vpop.f32.mrb[0].mxu0
        %v794 = vadd.f32 0.0, %v793
        %v795 = vpop.f32.mrb[0].mxu0
        %v796 = vpop.f32.mrb[0].mxu0
        %v797 = vadd.f32 0.0, %v796
        %v798 = vpop.f32.mrb[0].mxu0
        %799 = vmatprep.mubr.bf16.mxu0 0
        %800 = vmatmul.mubr.bf16.gmra.mrb[0].mxu0 %v592
        %v801 = vpop.f32.mrb[0].mxu0
        %v802 = vadd.f32 0.0, %v801
        %v803 = vpop.f32.mrb[0].mxu0
        %v804 = vpop.f32.mrb[0].mxu0
        %v805 = vadd.f32 0.0, %v804
        %v806 = vpop.f32.mrb[0].mxu0
        %807 = vmatprep.mubr.bf16.mxu0 0
        %808 = vmatmul.mubr.bf16.gmra.mrb[0].mxu0 %v593
        %v809 = vpop.f32.mrb[0].mxu0
        %v810 = vadd.f32 0.0, %v809
        %v811 = vpop.f32.mrb[0].mxu0
        %v812 = vpop.f32.mrb[0].mxu0
        %v813 = vadd.f32 0.0, %v812
        %v814 = vpop.f32.mrb[0].mxu0
        %815 = vmatprep.mubr.bf16.mxu0 0
        %816 = vmatmul.mubr.bf16.gmra.mrb[0].mxu0 %v594
        %v817 = vpop.f32.mrb[0].mxu0
        %v818 = vadd.f32 0.0, %v817
        %v819 = vpop.f32.mrb[0].mxu0
        %v820 = vpop.f32.mrb[0].mxu0
        %v821 = vadd.f32 0.0, %v820
        %v822 = vpop.f32.mrb[0].mxu0
        %823 = vmatprep.mubr.bf16.mxu0 0
        %824 = vmatmul.mubr.bf16.gmra.mrb[0].mxu0 %v595
        %v825 = vpop.f32.mrb[0].mxu0
        %v826 = vadd.f32 0.0, %v825
        %v827 = vpop.f32.mrb[0].mxu0
        %v828 = vpop.f32.mrb[0].mxu0
        %v829 = vadd.f32 0.0, %v828
        %v830 = vpop.f32.mrb[0].mxu0
        %831 = vmatprep.mubr.bf16.mxu0 0
        %832 = vmatmul.mubr.bf16.gmra.mrb[0].mxu0 %v596
        %v833 = vpop.f32.mrb[0].mxu0
        %v834 = vadd.f32 0.0, %v833
        %v835 = vpop.f32.mrb[0].mxu0
        %v836 = vpop.f32.mrb[0].mxu0
        %v837 = vadd.f32 0.0, %v836
        %v838 = vpop.f32.mrb[0].mxu0
        %839 = vmatprep.mubr.bf16.mxu0 0
        %840 = vmatmul.mubr.bf16.gmra.mrb[0].mxu0 %v597
        %v841 = vpop.f32.mrb[0].mxu0
        %v842 = vadd.f32 0.0, %v841
        %v843 = vpop.f32.mrb[0].mxu0
        %v844 = vpop.f32.mrb[0].mxu0
        %v845 = vadd.f32 0.0, %v844
        %v846 = vpop.f32.mrb[0].mxu0
        %847 = vmatprep.mubr.bf16.mxu0 0
        %848 = vmatmul.mubr.bf16.gmra.mrb[0].mxu0 %v598
        %v849 = vpop.f32.mrb[0].mxu0
        %v850 = vadd.f32 0.0, %v849
        %v851 = vpop.f32.mrb[0].mxu0
        %v852 = vpop.f32.mrb[0].mxu0
        %v853 = vadd.f32 0.0, %v852
        %v854 = vpop.f32.mrb[0].mxu0
        %855 = vmatprep.mubr.bf16.mxu0 0
        %856 = vmatmul.mubr.bf16.gmra.mrb[0].mxu0 %v599
        %v857 = vpop.f32.mrb[0].mxu0
        %v858 = vadd.f32 0.0, %v857
        %v859 = vpop.f32.mrb[0].mxu0
        %v860 = vpop.f32.mrb[0].mxu0
        %v861 = vadd.f32 0.0, %v860
        %v862 = vpop.f32.mrb[0].mxu0
        %863 = vmatprep.mubr.bf16.mxu0 0
        %864 = vmatmul.mubr.bf16.gmra.mrb[0].mxu0 %v600
        %v865 = vpop.f32.mrb[0].mxu0
        %v866 = vadd.f32 0.0, %v865
        %v867 = vpop.f32.mrb[0].mxu0
        %v868 = vpop.f32.mrb[0].mxu0
        %v869 = vadd.f32 0.0, %v868
        %v870 = vpop.f32.mrb[0].mxu0
        %871 = vmatprep.mubr.bf16.mxu0 0
        %872 = vmatmul.mubr.bf16.gmra.mrb[0].mxu0 %v601
        %v873 = vpop.f32.mrb[0].mxu0
        %v874 = vadd.f32 0.0, %v873
        %v875 = vpop.f32.mrb[0].mxu0
        %v876 = vpop.f32.mrb[0].mxu0
        %v877 = vadd.f32 0.0, %v876
        %v878 = vpop.f32.mrb[0].mxu0
        %879 = vmatprep.mubr.bf16.mxu0 0
        %880 = vmatmul.mubr.bf16.gmra.mrb[0].mxu0 %v602
        %v881 = vpop.f32.mrb[0].mxu0
        %v882 = vadd.f32 0.0, %v881
        %v883 = vpop.f32.mrb[0].mxu0
        %v884 = vpop.f32.mrb[0].mxu0
        %v885 = vadd.f32 0.0, %v884
        %v886 = vpop.f32.mrb[0].mxu0
        %887 = vmatprep.mubr.bf16.mxu0 0
        %888 = vmatmul.mubr.bf16.gmra.mrb[0].mxu0 %v603
        %v889 = vpop.f32.mrb[0].mxu0
        %v890 = vadd.f32 0.0, %v889
        %v891 = vpop.f32.mrb[0].mxu0
        %v892 = vpop.f32.mrb[0].mxu0
        %v893 = vadd.f32 0.0, %v892
        %v894 = vpop.f32.mrb[0].mxu0
        %895 = vmatprep.mubr.bf16.mxu0 0
        %896 = vmatmul.mubr.bf16.gmra.mrb[0].mxu0 %v604
        %v897 = vpop.f32.mrb[0].mxu0
        %v898 = vadd.f32 0.0, %v897
        %v899 = vpop.f32.mrb[0].mxu0
        %v900 = vpop.f32.mrb[0].mxu0
        %v901 = vadd.f32 0.0, %v900
        %v902 = vpop.f32.mrb[0].mxu0
        %903 = vmatprep.mubr.bf16.mxu0 0
        %904 = vmatmul.mubr.bf16.gmra.mrb[0].mxu0 %v605
        %v905 = vpop.f32.mrb[0].mxu0
        %v906 = vadd.f32 0.0, %v905
        %v907 = vpop.f32.mrb[0].mxu0
        %v908 = vpop.f32.mrb[0].mxu0
        %v909 = vadd.f32 0.0, %v908
        %v910 = vpop.f32.mrb[0].mxu0
        %911 = vmatprep.mubr.bf16.mxu0 0
        %912 = vmatmul.mubr.bf16.gmra.mrb[0].mxu0 %v606
        %v913 = vpop.f32.mrb[0].mxu0
        %v914 = vadd.f32 0.0, %v913
        %v915 = vpop.f32.mrb[0].mxu0
        %v916 = vpop.f32.mrb[0].mxu0
        %v917 = vadd.f32 0.0, %v916
        %v918 = vpop.f32.mrb[0].mxu0
        %919 = vmatprep.mubr.bf16.mxu0 0
        %920 = vmatmul.mubr.bf16.gmra.mrb[0].mxu0 %v607
        %v921 = vpop.f32.mrb[0].mxu0
        %v922 = vadd.f32 0.0, %v921
        %v923 = vpop.f32.mrb[0].mxu0
        %v924 = vpop.f32.mrb[0].mxu0
        %v925 = vadd.f32 0.0, %v924
        %v926 = vpop.f32.mrb[0].mxu0
        %927 = vmatprep.mubr.bf16.mxu0 0
        %928 = vmatmul.mubr.bf16.gmra.mrb[0].mxu0 %v608
        %v929 = vpop.f32.mrb[0].mxu0
        %v930 = vadd.f32 0.0, %v929
        %v931 = vpop.f32.mrb[0].mxu0
        %v932 = vpop.f32.mrb[0].mxu0
        %v933 = vadd.f32 0.0, %v932
        %v934 = vpop.f32.mrb[0].mxu0
        %935 = vmatprep.mubr.bf16.mxu0 0
        %936 = vmatmul.mubr.bf16.gmra.mrb[0].mxu0 %v609
        %v937 = vpop.f32.mrb[0].mxu0
        %v938 = vadd.f32 0.0, %v937
        %v939 = vpop.f32.mrb[0].mxu0
        %v940 = vpop.f32.mrb[0].mxu0
        %v941 = vadd.f32 0.0, %v940
        %v942 = vpop.f32.mrb[0].mxu0
        %943 = vmatprep.mubr.bf16.mxu0 0
        %944 = vmatmul.mubr.bf16.gmra.mrb[0].mxu0 %v610
        %v945 = vpop.f32.mrb[0].mxu0
        %v946 = vadd.f32 0.0, %v945
        %v947 = vpop.f32.mrb[0].mxu0
        %v948 = vpop.f32.mrb[0].mxu0
        %v949 = vadd.f32 0.0, %v948
        %v950 = vpop.f32.mrb[0].mxu0
        %951 = vmatprep.mubr.bf16.mxu0 0
        %952 = vmatmul.mubr.bf16.gmra.mrb[0].mxu0 %v611
        %v953 = vpop.f32.mrb[0].mxu0
        %v954 = vadd.f32 0.0, %v953
        %v955 = vpop.f32.mrb[0].mxu0
        %v956 = vpop.f32.mrb[0].mxu0
        %v957 = vadd.f32 0.0, %v956
        %v958 = vpop.f32.mrb[0].mxu0
        %959 = vmatprep.mubr.bf16.mxu0 0
        %960 = vmatmul.mubr.bf16.gmra.mrb[0].mxu0 %v612
        %v961 = vpop.f32.mrb[0].mxu0
        %v962 = vadd.f32 0.0, %v961
        %v963 = vpop.f32.mrb[0].mxu0
        %v964 = vpop.f32.mrb[0].mxu0
        %v965 = vadd.f32 0.0, %v964
        %v966 = vpop.f32.mrb[0].mxu0
        %967 = vmatprep.mubr.bf16.mxu0 0
        %968 = vmatmul.mubr.bf16.gmra.mrb[0].mxu0 %v613
        %v969 = vpop.f32.mrb[0].mxu0
        %v970 = vadd.f32 0.0, %v969
        %v971 = vpop.f32.mrb[0].mxu0
        %v972 = vpop.f32.mrb[0].mxu0
        %v973 = vadd.f32 0.0, %v972
        %v974 = vpop.f32.mrb[0].mxu0
        %975 = vmatprep.mubr.bf16.mxu0 0
        %976 = vmatmul.mubr.bf16.gmra.mrb[0].mxu0 %v614
        %v977 = vpop.f32.mrb[0].mxu0
        %v978 = vadd.f32 0.0, %v977
        %v979 = vpop.f32.mrb[0].mxu0
        %v980 = vpop.f32.mrb[0].mxu0
        %v981 = vadd.f32 0.0, %v980
        %v982 = vpop.f32.mrb[0].mxu0
        %983 = vdwg.mxu0
        %v984 = vadd.f32 %v311, %v730
        %v985 = vadd.f32 %v312, %v733
        %v986 = vadd.f32 %v313, %v738
        %v987 = vadd.f32 %v314, %v741
        %v988 = vadd.f32 %v315, %v746
        %v989 = vadd.f32 %v316, %v749
        %v990 = vadd.f32 %v317, %v754
        %v991 = vadd.f32 %v318, %v757
        %v992 = vadd.f32 %v319, %v762
        %v993 = vadd.f32 %v320, %v765
        %v994 = vadd.f32 %v321, %v770
        %v995 = vadd.f32 %v322, %v773
        %v996 = vadd.f32 %v323, %v778
        %v997 = vadd.f32 %v324, %v781
        %v998 = vadd.f32 %v325, %v786
        %v999 = vadd.f32 %v326, %v789
        %v1000 = vadd.f32 %v327, %v794
        %v1001 = vadd.f32 %v328, %v797
        %v1002 = vadd.f32 %v329, %v802
        %v1003 = vadd.f32 %v330, %v805
        %v1004 = vadd.f32 %v331, %v810
        %v1005 = vadd.f32 %v332, %v813
        %v1006 = vadd.f32 %v333, %v818
        %v1007 = vadd.f32 %v334, %v821
        %v1008 = vadd.f32 %v335, %v826
        %v1009 = vadd.f32 %v336, %v829
        %v1010 = vadd.f32 %v337, %v834
        %v1011 = vadd.f32 %v338, %v837
        %v1012 = vadd.f32 %v339, %v842
        %v1013 = vadd.f32 %v340, %v845
        %v1014 = vadd.f32 %v341, %v850
        %v1015 = vadd.f32 %v342, %v853
        %v1016 = vadd.f32 %v343, %v858
        %v1017 = vadd.f32 %v344, %v861
        %v1018 = vadd.f32 %v345, %v866
        %v1019 = vadd.f32 %v346, %v869
        %v1020 = vadd.f32 %v347, %v874
        %v1021 = vadd.f32 %v348, %v877
        %v1022 = vadd.f32 %v349, %v882
        %v1023 = vadd.f32 %v350, %v885
        %v1024 = vadd.f32 %v351, %v890
        %v1025 = vadd.f32 %v352, %v893
        %v1026 = vadd.f32 %v353, %v898
        %v1027 = vadd.f32 %v354, %v901
        %v1028 = vadd.f32 %v355, %v906
        %v1029 = vadd.f32 %v356, %v909
        %v1030 = vadd.f32 %v357, %v914
        %v1031 = vadd.f32 %v358, %v917
        %v1032 = vadd.f32 %v359, %v922
        %v1033 = vadd.f32 %v360, %v925
        %v1034 = vadd.f32 %v361, %v930
        %v1035 = vadd.f32 %v362, %v933
        %v1036 = vadd.f32 %v363, %v938
        %v1037 = vadd.f32 %v364, %v941
        %v1038 = vadd.f32 %v365, %v946
        %v1039 = vadd.f32 %v366, %v949
        %v1040 = vadd.f32 %v367, %v954
        %v1041 = vadd.f32 %v368, %v957
        %v1042 = vadd.f32 %v369, %v962
        %v1043 = vadd.f32 %v370, %v965
        %v1044 = vadd.f32 %v371, %v970
        %v1045 = vadd.f32 %v372, %v973
        %v1046 = vadd.f32 %v373, %v978
        %v1047 = vadd.f32 %v374, %v981
        %1048 = vst [vmem:[%s238] sm:$0xff] %v984
        %1049 = vst [vmem:[%s238 + $0x8] sm:$0xff] %v985
        %1050 = vst [vmem:[%s238 + $0x10] sm:$0xff] %v986
        %1051 = vst [vmem:[%s238 + $0x18] sm:$0xff] %v987
        %1052 = vst [vmem:[%s238 + $0x20] sm:$0xff] %v988
        %1053 = vst [vmem:[%s238 + $0x28] sm:$0xff] %v989
        %1054 = vst [vmem:[%s238 + $0x30] sm:$0xff] %v990
        %1055 = vst [vmem:[%s238 + $0x38] sm:$0xff] %v991
        %1056 = vst [vmem:[%s238 + $0x40] sm:$0xff] %v992
        %1057 = vst [vmem:[%s238 + $0x48] sm:$0xff] %v993
        %1058 = vst [vmem:[%s238 + $0x50] sm:$0xff] %v994
        %1059 = vst [vmem:[%s238 + $0x58] sm:$0xff] %v995
        %1060 = vst [vmem:[%s238 + $0x60] sm:$0xff] %v996
        %1061 = vst [vmem:[%s238 + $0x68] sm:$0xff] %v997
        %1062 = vst [vmem:[%s238 + $0x70] sm:$0xff] %v998
        %1063 = vst [vmem:[%s238 + $0x78] sm:$0xff] %v999
        %1064 = vst [vmem:[%s238 + $0x80] sm:$0xff] %v1000
        %1065 = vst [vmem:[%s238 + $0x88] sm:$0xff] %v1001
        %1066 = vst [vmem:[%s238 + $0x90] sm:$0xff] %v1002
        %1067 = vst [vmem:[%s238 + $0x98] sm:$0xff] %v1003
        %1068 = vst [vmem:[%s238 + $0xa0] sm:$0xff] %v1004
        %1069 = vst [vmem:[%s238 + $0xa8] sm:$0xff] %v1005
        %1070 = vst [vmem:[%s238 + $0xb0] sm:$0xff] %v1006
        %1071 = vst [vmem:[%s238 + $0xb8] sm:$0xff] %v1007
        %1072 = vst [vmem:[%s238 + $0xc0] sm:$0xff] %v1008
        %1073 = vst [vmem:[%s238 + $0xc8] sm:$0xff] %v1009
        %1074 = vst [vmem:[%s238 + $0xd0] sm:$0xff] %v1010
        %1075 = vst [vmem:[%s238 + $0xd8] sm:$0xff] %v1011
        %1076 = vst [vmem:[%s238 + $0xe0] sm:$0xff] %v1012
        %1077 = vst [vmem:[%s238 + $0xe8] sm:$0xff] %v1013
        %1078 = vst [vmem:[%s238 + $0xf0] sm:$0xff] %v1014
        %1079 = vst [vmem:[%s238 + $0xf8] sm:$0xff] %v1015
        %1080 = vst [vmem:[%s238 + $0x100] sm:$0xff] %v1016
        %1081 = vst [vmem:[%s238 + $0x108] sm:$0xff] %v1017
        %1082 = vst [vmem:[%s238 + $0x110] sm:$0xff] %v1018
        %1083 = vst [vmem:[%s238 + $0x118] sm:$0xff] %v1019
        %1084 = vst [vmem:[%s238 + $0x120] sm:$0xff] %v1020
        %1085 = vst [vmem:[%s238 + $0x128] sm:$0xff] %v1021
        %1086 = vst [vmem:[%s238 + $0x130] sm:$0xff] %v1022
        %1087 = vst [vmem:[%s238 + $0x138] sm:$0xff] %v1023
        %1088 = vst [vmem:[%s238 + $0x140] sm:$0xff] %v1024
        %1089 = vst [vmem:[%s238 + $0x148] sm:$0xff] %v1025
        %1090 = vst [vmem:[%s238 + $0x150] sm:$0xff] %v1026
        %1091 = vst [vmem:[%s238 + $0x158] sm:$0xff] %v1027
        %1092 = vst [vmem:[%s238 + $0x160] sm:$0xff] %v1028
        %1093 = vst [vmem:[%s238 + $0x168] sm:$0xff] %v1029
        %1094 = vst [vmem:[%s238 + $0x170] sm:$0xff] %v1030
        %1095 = vst [vmem:[%s238 + $0x178] sm:$0xff] %v1031
        %1096 = vst [vmem:[%s238 + $0x180] sm:$0xff] %v1032
        %1097 = vst [vmem:[%s238 + $0x188] sm:$0xff] %v1033
        %1098 = vst [vmem:[%s238 + $0x190] sm:$0xff] %v1034
        %1099 = vst [vmem:[%s238 + $0x198] sm:$0xff] %v1035
        %1100 = vst [vmem:[%s238 + $0x1a0] sm:$0xff] %v1036
        %1101 = vst [vmem:[%s238 + $0x1a8] sm:$0xff] %v1037
        %1102 = vst [vmem:[%s238 + $0x1b0] sm:$0xff] %v1038
        %1103 = vst [vmem:[%s238 + $0x1b8] sm:$0xff] %v1039
        %1104 = vst [vmem:[%s238 + $0x1c0] sm:$0xff] %v1040
        %1105 = vst [vmem:[%s238 + $0x1c8] sm:$0xff] %v1041
        %1106 = vst [vmem:[%s238 + $0x1d0] sm:$0xff] %v1042
        %1107 = vst [vmem:[%s238 + $0x1d8] sm:$0xff] %v1043
        %1108 = vst [vmem:[%s238 + $0x1e0] sm:$0xff] %v1044
        %1109 = vst [vmem:[%s238 + $0x1e8] sm:$0xff] %v1045
        %1110 = vst [vmem:[%s238 + $0x1f0] sm:$0xff] %v1046
        %1111 = vst [vmem:[%s238 + $0x1f8] sm:$0xff] %v1047
        // Predicated region
        $region49: #{tpu_custom_call.1} parent=31 // pred_check
          %p1112 = pneg %p243
        $region50: #{tpu_custom_call.1} parent=31 // pred_check_branch
          %1114 = sbr.rel (%p1112) target = $region52
        $region51: #{tpu_custom_call.1} parent=31 // pred_region
          %v1115 = vld [vmem:[%s238] sm:$0xff]
          %v1116 = vld [vmem:[%s238 + $0x8] sm:$0xff]
          %v1117 = vld [vmem:[%s238 + $0x10] sm:$0xff]
          %v1118 = vld [vmem:[%s238 + $0x18] sm:$0xff]
          %v1119 = vld [vmem:[%s238 + $0x20] sm:$0xff]
          %v1120 = vld [vmem:[%s238 + $0x28] sm:$0xff]
          %v1121 = vld [vmem:[%s238 + $0x30] sm:$0xff]
          %v1122 = vld [vmem:[%s238 + $0x38] sm:$0xff]
          %v1123 = vld [vmem:[%s238 + $0x40] sm:$0xff]
          %v1124 = vld [vmem:[%s238 + $0x48] sm:$0xff]
          %v1125 = vld [vmem:[%s238 + $0x50] sm:$0xff]
          %v1126 = vld [vmem:[%s238 + $0x58] sm:$0xff]
          %v1127 = vld [vmem:[%s238 + $0x60] sm:$0xff]
          %v1128 = vld [vmem:[%s238 + $0x68] sm:$0xff]
          %v1129 = vld [vmem:[%s238 + $0x70] sm:$0xff]
          %v1130 = vld [vmem:[%s238 + $0x78] sm:$0xff]
          %v1131 = vld [vmem:[%s238 + $0x80] sm:$0xff]
          %v1132 = vld [vmem:[%s238 + $0x88] sm:$0xff]
          %v1133 = vld [vmem:[%s238 + $0x90] sm:$0xff]
          %v1134 = vld [vmem:[%s238 + $0x98] sm:$0xff]
          %v1135 = vld [vmem:[%s238 + $0xa0] sm:$0xff]
          %v1136 = vld [vmem:[%s238 + $0xa8] sm:$0xff]
          %v1137 = vld [vmem:[%s238 + $0xb0] sm:$0xff]
          %v1138 = vld [vmem:[%s238 + $0xb8] sm:$0xff]
          %v1139 = vld [vmem:[%s238 + $0xc0] sm:$0xff]
          %v1140 = vld [vmem:[%s238 + $0xc8] sm:$0xff]
          %v1141 = vld [vmem:[%s238 + $0xd0] sm:$0xff]
          %v1142 = vld [vmem:[%s238 + $0xd8] sm:$0xff]
          %v1143 = vld [vmem:[%s238 + $0xe0] sm:$0xff]
          %v1144 = vld [vmem:[%s238 + $0xe8] sm:$0xff]
          %v1145 = vld [vmem:[%s238 + $0xf0] sm:$0xff]
          %v1146 = vld [vmem:[%s238 + $0xf8] sm:$0xff]
          %v1147 = vld [vmem:[%s238 + $0x100] sm:$0xff]
          %v1148 = vld [vmem:[%s238 + $0x108] sm:$0xff]
          %v1149 = vld [vmem:[%s238 + $0x110] sm:$0xff]
          %v1150 = vld [vmem:[%s238 + $0x118] sm:$0xff]
          %v1151 = vld [vmem:[%s238 + $0x120] sm:$0xff]
          %v1152 = vld [vmem:[%s238 + $0x128] sm:$0xff]
          %v1153 = vld [vmem:[%s238 + $0x130] sm:$0xff]
          %v1154 = vld [vmem:[%s238 + $0x138] sm:$0xff]
          %v1155 = vld [vmem:[%s238 + $0x140] sm:$0xff]
          %v1156 = vld [vmem:[%s238 + $0x148] sm:$0xff]
          %v1157 = vld [vmem:[%s238 + $0x150] sm:$0xff]
          %v1158 = vld [vmem:[%s238 + $0x158] sm:$0xff]
          %v1159 = vld [vmem:[%s238 + $0x160] sm:$0xff]
          %v1160 = vld [vmem:[%s238 + $0x168] sm:$0xff]
          %v1161 = vld [vmem:[%s238 + $0x170] sm:$0xff]
          %v1162 = vld [vmem:[%s238 + $0x178] sm:$0xff]
          %v1163 = vld [vmem:[%s238 + $0x180] sm:$0xff]
          %v1164 = vld [vmem:[%s238 + $0x188] sm:$0xff]
          %v1165 = vld [vmem:[%s238 + $0x190] sm:$0xff]
          %v1166 = vld [vmem:[%s238 + $0x198] sm:$0xff]
          %v1167 = vld [vmem:[%s238 + $0x1a0] sm:$0xff]
          %v1168 = vld [vmem:[%s238 + $0x1a8] sm:$0xff]
          %v1169 = vld [vmem:[%s238 + $0x1b0] sm:$0xff]
          %v1170 = vld [vmem:[%s238 + $0x1b8] sm:$0xff]
          %v1171 = vld [vmem:[%s238 + $0x1c0] sm:$0xff]
          %v1172 = vld [vmem:[%s238 + $0x1c8] sm:$0xff]
          %v1173 = vld [vmem:[%s238 + $0x1d0] sm:$0xff]
          %v1174 = vld [vmem:[%s238 + $0x1d8] sm:$0xff]
          %v1175 = vld [vmem:[%s238 + $0x1e0] sm:$0xff]
          %v1176 = vld [vmem:[%s238 + $0x1e8] sm:$0xff]
          %v1177 = vld [vmem:[%s238 + $0x1f0] sm:$0xff]
          %v1178 = vld [vmem:[%s238 + $0x1f8] sm:$0xff]
          %v1179 = vld [vmem:[#allocation7] sm:$0x1]
          %v1181 = vlaneseq
          %v1182 = vshrl.u32 %v1181, 7
          %v1183 = vsub.s32 0, %v1182
          %v1184 = vrot.slane %v1179, %v1183
          %v1186 = vadd.f32 %v1115, %v1184
          %v1187 = vadd.f32 %v1116, %v1184
          %v1188 = vadd.f32 %v1117, %v1184
          %v1189 = vadd.f32 %v1118, %v1184
          %v1190 = vadd.f32 %v1119, %v1184
          %v1191 = vadd.f32 %v1120, %v1184
          %v1192 = vadd.f32 %v1121, %v1184
          %v1193 = vadd.f32 %v1122, %v1184
          %v1194 = vadd.f32 %v1123, %v1184
          %v1195 = vadd.f32 %v1124, %v1184
          %v1196 = vadd.f32 %v1125, %v1184
          %v1197 = vadd.f32 %v1126, %v1184
          %v1198 = vadd.f32 %v1127, %v1184
          %v1199 = vadd.f32 %v1128, %v1184
          %v1200 = vadd.f32 %v1129, %v1184
          %v1201 = vadd.f32 %v1130, %v1184
          %v1202 = vadd.f32 %v1131, %v1184
          %v1203 = vadd.f32 %v1132, %v1184
          %v1204 = vadd.f32 %v1133, %v1184
          %v1205 = vadd.f32 %v1134, %v1184
          %v1206 = vadd.f32 %v1135, %v1184
          %v1207 = vadd.f32 %v1136, %v1184
          %v1208 = vadd.f32 %v1137, %v1184
          %v1209 = vadd.f32 %v1138, %v1184
          %v1210 = vadd.f32 %v1139, %v1184
          %v1211 = vadd.f32 %v1140, %v1184
          %v1212 = vadd.f32 %v1141, %v1184
          %v1213 = vadd.f32 %v1142, %v1184
          %v1214 = vadd.f32 %v1143, %v1184
          %v1215 = vadd.f32 %v1144, %v1184
          %v1216 = vadd.f32 %v1145, %v1184
          %v1217 = vadd.f32 %v1146, %v1184
          %v1218 = vadd.f32 %v1147, %v1184
          %v1219 = vadd.f32 %v1148, %v1184
          %v1220 = vadd.f32 %v1149, %v1184
          %v1221 = vadd.f32 %v1150, %v1184
          %v1222 = vadd.f32 %v1151, %v1184
          %v1223 = vadd.f32 %v1152, %v1184
          %v1224 = vadd.f32 %v1153, %v1184
          %v1225 = vadd.f32 %v1154, %v1184
          %v1226 = vadd.f32 %v1155, %v1184
          %v1227 = vadd.f32 %v1156, %v1184
          %v1228 = vadd.f32 %v1157, %v1184
          %v1229 = vadd.f32 %v1158, %v1184
          %v1230 = vadd.f32 %v1159, %v1184
          %v1231 = vadd.f32 %v1160, %v1184
          %v1232 = vadd.f32 %v1161, %v1184
          %v1233 = vadd.f32 %v1162, %v1184
          %v1234 = vadd.f32 %v1163, %v1184
          %v1235 = vadd.f32 %v1164, %v1184
          %v1236 = vadd.f32 %v1165, %v1184
          %v1237 = vadd.f32 %v1166, %v1184
          %v1238 = vadd.f32 %v1167, %v1184
          %v1239 = vadd.f32 %v1168, %v1184
          %v1240 = vadd.f32 %v1169, %v1184
          %v1241 = vadd.f32 %v1170, %v1184
          %v1242 = vadd.f32 %v1171, %v1184
          %v1243 = vadd.f32 %v1172, %v1184
          %v1244 = vadd.f32 %v1173, %v1184
          %v1245 = vadd.f32 %v1174, %v1184
          %v1246 = vadd.f32 %v1175, %v1184
          %v1247 = vadd.f32 %v1176, %v1184
          %v1248 = vadd.f32 %v1177, %v1184
          %v1249 = vadd.f32 %v1178, %v1184
          %vm1250 = vcmp.ge.f32.partialorder %v1186, 0.0
          %vm1251 = vcmp.ge.f32.partialorder %v1187, 0.0
          %vm1252 = vcmp.ge.f32.partialorder %v1188, 0.0
          %vm1253 = vcmp.ge.f32.partialorder %v1189, 0.0
          %vm1254 = vcmp.ge.f32.partialorder %v1190, 0.0
          %vm1255 = vcmp.ge.f32.partialorder %v1191, 0.0
          %vm1256 = vcmp.ge.f32.partialorder %v1192, 0.0
          %vm1257 = vcmp.ge.f32.partialorder %v1193, 0.0
          %vm1258 = vcmp.ge.f32.partialorder %v1194, 0.0
          %vm1259 = vcmp.ge.f32.partialorder %v1195, 0.0
          %vm1260 = vcmp.ge.f32.partialorder %v1196, 0.0
          %vm1261 = vcmp.ge.f32.partialorder %v1197, 0.0
          %vm1262 = vcmp.ge.f32.partialorder %v1198, 0.0
          %vm1263 = vcmp.ge.f32.partialorder %v1199, 0.0
          %vm1264 = vcmp.ge.f32.partialorder %v1200, 0.0
          %vm1265 = vcmp.ge.f32.partialorder %v1201, 0.0
          %vm1266 = vcmp.ge.f32.partialorder %v1202, 0.0
          %vm1267 = vcmp.ge.f32.partialorder %v1203, 0.0
          %vm1268 = vcmp.ge.f32.partialorder %v1204, 0.0
          %vm1269 = vcmp.ge.f32.partialorder %v1205, 0.0
          %vm1270 = vcmp.ge.f32.partialorder %v1206, 0.0
          %vm1271 = vcmp.ge.f32.partialorder %v1207, 0.0
          %vm1272 = vcmp.ge.f32.partialorder %v1208, 0.0
          %vm1273 = vcmp.ge.f32.partialorder %v1209, 0.0
          %vm1274 = vcmp.ge.f32.partialorder %v1210, 0.0
          %vm1275 = vcmp.ge.f32.partialorder %v1211, 0.0
          %vm1276 = vcmp.ge.f32.partialorder %v1212, 0.0
          %vm1277 = vcmp.ge.f32.partialorder %v1213, 0.0
          %vm1278 = vcmp.ge.f32.partialorder %v1214, 0.0
          %vm1279 = vcmp.ge.f32.partialorder %v1215, 0.0
          %vm1280 = vcmp.ge.f32.partialorder %v1216, 0.0
          %vm1281 = vcmp.ge.f32.partialorder %v1217, 0.0
          %vm1282 = vcmp.ge.f32.partialorder %v1218, 0.0
          %vm1283 = vcmp.ge.f32.partialorder %v1219, 0.0
          %vm1284 = vcmp.ge.f32.partialorder %v1220, 0.0
          %vm1285 = vcmp.ge.f32.partialorder %v1221, 0.0
          %vm1286 = vcmp.ge.f32.partialorder %v1222, 0.0
          %vm1287 = vcmp.ge.f32.partialorder %v1223, 0.0
          %vm1288 = vcmp.ge.f32.partialorder %v1224, 0.0
          %vm1289 = vcmp.ge.f32.partialorder %v1225, 0.0
          %vm1290 = vcmp.ge.f32.partialorder %v1226, 0.0
          %vm1291 = vcmp.ge.f32.partialorder %v1227, 0.0
          %vm1292 = vcmp.ge.f32.partialorder %v1228, 0.0
          %vm1293 = vcmp.ge.f32.partialorder %v1229, 0.0
          %vm1294 = vcmp.ge.f32.partialorder %v1230, 0.0
          %vm1295 = vcmp.ge.f32.partialorder %v1231, 0.0
          %vm1296 = vcmp.ge.f32.partialorder %v1232, 0.0
          %vm1297 = vcmp.ge.f32.partialorder %v1233, 0.0
          %vm1298 = vcmp.ge.f32.partialorder %v1234, 0.0
          %vm1299 = vcmp.ge.f32.partialorder %v1235, 0.0
          %vm1300 = vcmp.ge.f32.partialorder %v1236, 0.0
          %vm1301 = vcmp.ge.f32.partialorder %v1237, 0.0
          %vm1302 = vcmp.ge.f32.partialorder %v1238, 0.0
          %vm1303 = vcmp.ge.f32.partialorder %v1239, 0.0
          %vm1304 = vcmp.ge.f32.partialorder %v1240, 0.0
          %vm1305 = vcmp.ge.f32.partialorder %v1241, 0.0
          %vm1306 = vcmp.ge.f32.partialorder %v1242, 0.0
          %vm1307 = vcmp.ge.f32.partialorder %v1243, 0.0
          %vm1308 = vcmp.ge.f32.partialorder %v1244, 0.0
          %vm1309 = vcmp.ge.f32.partialorder %v1245, 0.0
          %vm1310 = vcmp.ge.f32.partialorder %v1246, 0.0
          %vm1311 = vcmp.ge.f32.partialorder %v1247, 0.0
          %vm1312 = vcmp.ge.f32.partialorder %v1248, 0.0
          %vm1313 = vcmp.ge.f32.partialorder %v1249, 0.0
          %v1314 = vmul.f32 %v1186, 0.2
          %v1315 = vmul.f32 %v1187, 0.2
          %v1316 = vmul.f32 %v1188, 0.2
          %v1317 = vmul.f32 %v1189, 0.2
          %v1318 = vmul.f32 %v1190, 0.2
          %v1319 = vmul.f32 %v1191, 0.2
          %v1320 = vmul.f32 %v1192, 0.2
          %v1321 = vmul.f32 %v1193, 0.2
          %v1322 = vmul.f32 %v1194, 0.2
          %v1323 = vmul.f32 %v1195, 0.2
          %v1324 = vmul.f32 %v1196, 0.2
          %v1325 = vmul.f32 %v1197, 0.2
          %v1326 = vmul.f32 %v1198, 0.2
          %v1327 = vmul.f32 %v1199, 0.2
          %v1328 = vmul.f32 %v1200, 0.2
          %v1329 = vmul.f32 %v1201, 0.2
          %v1330 = vmul.f32 %v1202, 0.2
          %v1331 = vmul.f32 %v1203, 0.2
          %v1332 = vmul.f32 %v1204, 0.2
          %v1333 = vmul.f32 %v1205, 0.2
          %v1334 = vmul.f32 %v1206, 0.2
          %v1335 = vmul.f32 %v1207, 0.2
          %v1336 = vmul.f32 %v1208, 0.2
          %v1337 = vmul.f32 %v1209, 0.2
          %v1338 = vmul.f32 %v1210, 0.2
          %v1339 = vmul.f32 %v1211, 0.2
          %v1340 = vmul.f32 %v1212, 0.2
          %v1341 = vmul.f32 %v1213, 0.2
          %v1342 = vmul.f32 %v1214, 0.2
          %v1343 = vmul.f32 %v1215, 0.2
          %v1344 = vmul.f32 %v1216, 0.2
          %v1345 = vmul.f32 %v1217, 0.2
          %v1346 = vmul.f32 %v1218, 0.2
          %v1347 = vmul.f32 %v1219, 0.2
          %v1348 = vmul.f32 %v1220, 0.2
          %v1349 = vmul.f32 %v1221, 0.2
          %v1350 = vmul.f32 %v1222, 0.2
          %v1351 = vmul.f32 %v1223, 0.2
          %v1352 = vmul.f32 %v1224, 0.2
          %v1353 = vmul.f32 %v1225, 0.2
          %v1354 = vmul.f32 %v1226, 0.2
          %v1355 = vmul.f32 %v1227, 0.2
          %v1356 = vmul.f32 %v1228, 0.2
          %v1357 = vmul.f32 %v1229, 0.2
          %v1358 = vmul.f32 %v1230, 0.2
          %v1359 = vmul.f32 %v1231, 0.2
          %v1360 = vmul.f32 %v1232, 0.2
          %v1361 = vmul.f32 %v1233, 0.2
          %v1362 = vmul.f32 %v1234, 0.2
          %v1363 = vmul.f32 %v1235, 0.2
          %v1364 = vmul.f32 %v1236, 0.2
          %v1365 = vmul.f32 %v1237, 0.2
          %v1366 = vmul.f32 %v1238, 0.2
          %v1367 = vmul.f32 %v1239, 0.2
          %v1368 = vmul.f32 %v1240, 0.2
          %v1369 = vmul.f32 %v1241, 0.2
          %v1370 = vmul.f32 %v1242, 0.2
          %v1371 = vmul.f32 %v1243, 0.2
          %v1372 = vmul.f32 %v1244, 0.2
          %v1373 = vmul.f32 %v1245, 0.2
          %v1374 = vmul.f32 %v1246, 0.2
          %v1375 = vmul.f32 %v1247, 0.2
          %v1376 = vmul.f32 %v1248, 0.2
          %v1377 = vmul.f32 %v1249, 0.2
          %v1378 = vsel %vm1250, %v1186, %v1314
          %v1379 = vsel %vm1251, %v1187, %v1315
          %v1380 = vsel %vm1252, %v1188, %v1316
          %v1381 = vsel %vm1253, %v1189, %v1317
          %v1382 = vsel %vm1254, %v1190, %v1318
          %v1383 = vsel %vm1255, %v1191, %v1319
          %v1384 = vsel %vm1256, %v1192, %v1320
          %v1385 = vsel %vm1257, %v1193, %v1321
          %v1386 = vsel %vm1258, %v1194, %v1322
          %v1387 = vsel %vm1259, %v1195, %v1323
          %v1388 = vsel %vm1260, %v1196, %v1324
          %v1389 = vsel %vm1261, %v1197, %v1325
          %v1390 = vsel %vm1262, %v1198, %v1326
          %v1391 = vsel %vm1263, %v1199, %v1327
          %v1392 = vsel %vm1264, %v1200, %v1328
          %v1393 = vsel %vm1265, %v1201, %v1329
          %v1394 = vsel %vm1266, %v1202, %v1330
          %v1395 = vsel %vm1267, %v1203, %v1331
          %v1396 = vsel %vm1268, %v1204, %v1332
          %v1397 = vsel %vm1269, %v1205, %v1333
          %v1398 = vsel %vm1270, %v1206, %v1334
          %v1399 = vsel %vm1271, %v1207, %v1335
          %v1400 = vsel %vm1272, %v1208, %v1336
          %v1401 = vsel %vm1273, %v1209, %v1337
          %v1402 = vsel %vm1274, %v1210, %v1338
          %v1403 = vsel %vm1275, %v1211, %v1339
          %v1404 = vsel %vm1276, %v1212, %v1340
          %v1405 = vsel %vm1277, %v1213, %v1341
          %v1406 = vsel %vm1278, %v1214, %v1342
          %v1407 = vsel %vm1279, %v1215, %v1343
          %v1408 = vsel %vm1280, %v1216, %v1344
          %v1409 = vsel %vm1281, %v1217, %v1345
          %v1410 = vsel %vm1282, %v1218, %v1346
          %v1411 = vsel %vm1283, %v1219, %v1347
          %v1412 = vsel %vm1284, %v1220, %v1348
          %v1413 = vsel %vm1285, %v1221, %v1349
          %v1414 = vsel %vm1286, %v1222, %v1350
          %v1415 = vsel %vm1287, %v1223, %v1351
          %v1416 = vsel %vm1288, %v1224, %v1352
          %v1417 = vsel %vm1289, %v1225, %v1353
          %v1418 = vsel %vm1290, %v1226, %v1354
          %v1419 = vsel %vm1291, %v1227, %v1355
          %v1420 = vsel %vm1292, %v1228, %v1356
          %v1421 = vsel %vm1293, %v1229, %v1357
          %v1422 = vsel %vm1294, %v1230, %v1358
          %v1423 = vsel %vm1295, %v1231, %v1359
          %v1424 = vsel %vm1296, %v1232, %v1360
          %v1425 = vsel %vm1297, %v1233, %v1361
          %v1426 = vsel %vm1298, %v1234, %v1362
          %v1427 = vsel %vm1299, %v1235, %v1363
          %v1428 = vsel %vm1300, %v1236, %v1364
          %v1429 = vsel %vm1301, %v1237, %v1365
          %v1430 = vsel %vm1302, %v1238, %v1366
          %v1431 = vsel %vm1303, %v1239, %v1367
          %v1432 = vsel %vm1304, %v1240, %v1368
          %v1433 = vsel %vm1305, %v1241, %v1369
          %v1434 = vsel %vm1306, %v1242, %v1370
          %v1435 = vsel %vm1307, %v1243, %v1371
          %v1436 = vsel %vm1308, %v1244, %v1372
          %v1437 = vsel %vm1309, %v1245, %v1373
          %v1438 = vsel %vm1310, %v1246, %v1374
          %v1439 = vsel %vm1311, %v1247, %v1375
          %v1440 = vsel %vm1312, %v1248, %v1376
          %v1441 = vsel %vm1313, %v1249, %v1377
          %1442 = vst [vmem:[%s238] sm:$0xff] %v1378
          %1443 = vst [vmem:[%s238 + $0x8] sm:$0xff] %v1379
          %1444 = vst [vmem:[%s238 + $0x10] sm:$0xff] %v1380
          %1445 = vst [vmem:[%s238 + $0x18] sm:$0xff] %v1381
          %1446 = vst [vmem:[%s238 + $0x20] sm:$0xff] %v1382
          %1447 = vst [vmem:[%s238 + $0x28] sm:$0xff] %v1383
          %1448 = vst [vmem:[%s238 + $0x30] sm:$0xff] %v1384
          %1449 = vst [vmem:[%s238 + $0x38] sm:$0xff] %v1385
          %1450 = vst [vmem:[%s238 + $0x40] sm:$0xff] %v1386
          %1451 = vst [vmem:[%s238 + $0x48] sm:$0xff] %v1387
          %1452 = vst [vmem:[%s238 + $0x50] sm:$0xff] %v1388
          %1453 = vst [vmem:[%s238 + $0x58] sm:$0xff] %v1389
          %1454 = vst [vmem:[%s238 + $0x60] sm:$0xff] %v1390
          %1455 = vst [vmem:[%s238 + $0x68] sm:$0xff] %v1391
          %1456 = vst [vmem:[%s238 + $0x70] sm:$0xff] %v1392
          %1457 = vst [vmem:[%s238 + $0x78] sm:$0xff] %v1393
          %1458 = vst [vmem:[%s238 + $0x80] sm:$0xff] %v1394
          %1459 = vst [vmem:[%s238 + $0x88] sm:$0xff] %v1395
          %1460 = vst [vmem:[%s238 + $0x90] sm:$0xff] %v1396
          %1461 = vst [vmem:[%s238 + $0x98] sm:$0xff] %v1397
          %1462 = vst [vmem:[%s238 + $0xa0] sm:$0xff] %v1398
          %1463 = vst [vmem:[%s238 + $0xa8] sm:$0xff] %v1399
          %1464 = vst [vmem:[%s238 + $0xb0] sm:$0xff] %v1400
          %1465 = vst [vmem:[%s238 + $0xb8] sm:$0xff] %v1401
          %1466 = vst [vmem:[%s238 + $0xc0] sm:$0xff] %v1402
          %1467 = vst [vmem:[%s238 + $0xc8] sm:$0xff] %v1403
          %1468 = vst [vmem:[%s238 + $0xd0] sm:$0xff] %v1404
          %1469 = vst [vmem:[%s238 + $0xd8] sm:$0xff] %v1405
          %1470 = vst [vmem:[%s238 + $0xe0] sm:$0xff] %v1406
          %1471 = vst [vmem:[%s238 + $0xe8] sm:$0xff] %v1407
          %1472 = vst [vmem:[%s238 + $0xf0] sm:$0xff] %v1408
          %1473 = vst [vmem:[%s238 + $0xf8] sm:$0xff] %v1409
          %1474 = vst [vmem:[%s238 + $0x100] sm:$0xff] %v1410
          %1475 = vst [vmem:[%s238 + $0x108] sm:$0xff] %v1411
          %1476 = vst [vmem:[%s238 + $0x110] sm:$0xff] %v1412
          %1477 = vst [vmem:[%s238 + $0x118] sm:$0xff] %v1413
          %1478 = vst [vmem:[%s238 + $0x120] sm:$0xff] %v1414
          %1479 = vst [vmem:[%s238 + $0x128] sm:$0xff] %v1415
          %1480 = vst [vmem:[%s238 + $0x130] sm:$0xff] %v1416
          %1481 = vst [vmem:[%s238 + $0x138] sm:$0xff] %v1417
          %1482 = vst [vmem:[%s238 + $0x140] sm:$0xff] %v1418
          %1483 = vst [vmem:[%s238 + $0x148] sm:$0xff] %v1419
          %1484 = vst [vmem:[%s238 + $0x150] sm:$0xff] %v1420
          %1485 = vst [vmem:[%s238 + $0x158] sm:$0xff] %v1421
          %1486 = vst [vmem:[%s238 + $0x160] sm:$0xff] %v1422
          %1487 = vst [vmem:[%s238 + $0x168] sm:$0xff] %v1423
          %1488 = vst [vmem:[%s238 + $0x170] sm:$0xff] %v1424
          %1489 = vst [vmem:[%s238 + $0x178] sm:$0xff] %v1425
          %1490 = vst [vmem:[%s238 + $0x180] sm:$0xff] %v1426
          %1491 = vst [vmem:[%s238 + $0x188] sm:$0xff] %v1427
          %1492 = vst [vmem:[%s238 + $0x190] sm:$0xff] %v1428
          %1493 = vst [vmem:[%s238 + $0x198] sm:$0xff] %v1429
          %1494 = vst [vmem:[%s238 + $0x1a0] sm:$0xff] %v1430
          %1495 = vst [vmem:[%s238 + $0x1a8] sm:$0xff] %v1431
          %1496 = vst [vmem:[%s238 + $0x1b0] sm:$0xff] %v1432
          %1497 = vst [vmem:[%s238 + $0x1b8] sm:$0xff] %v1433
          %1498 = vst [vmem:[%s238 + $0x1c0] sm:$0xff] %v1434
          %1499 = vst [vmem:[%s238 + $0x1c8] sm:$0xff] %v1435
          %1500 = vst [vmem:[%s238 + $0x1d0] sm:$0xff] %v1436
          %1501 = vst [vmem:[%s238 + $0x1d8] sm:$0xff] %v1437
          %1502 = vst [vmem:[%s238 + $0x1e0] sm:$0xff] %v1438
          %1503 = vst [vmem:[%s238 + $0x1e8] sm:$0xff] %v1439
          %1504 = vst [vmem:[%s238 + $0x1f0] sm:$0xff] %v1440
          %1505 = vst [vmem:[%s238 + $0x1f8] sm:$0xff] %v1441
        $region52: #{tpu_custom_call.1} parent=31 // pred_fallthru
          _
        %s1506 = sand.u32 %s116, 1
        %s1507 = scalar_lea.sflag [#allocation4], %s1506
        %s1508 = sand.u32 %s116, 1
        %s1509 = smul.addr %s1508, 512
        %s1510 = scalar_lea.vmem [#allocation8], %s1509
        // Predicated region
        $region53: #{tpu_custom_call.1} parent=31 // pred_check
          %p1511 = pneg %p126
        $region54: #{tpu_custom_call.1} parent=31 // pred_check_branch
          %1513 = sbr.rel (%p1511) target = $region56
        $region55: #{tpu_custom_call.1} parent=31 // pred_region
          %s1514 = smul.u32 64, %s25
          %s1516 = ssub.s32 8192, 8192
          %1517 = vsyncadd %s1507, %s1516
          %s1518 = smul.addr %s1514, 128
          %s1519 = scalar_lea.hbm %s3, %s1518
          %s1520 = sshll.u32 %s1510, 4
          %s1521 = int_to_ptr.vmem [resolvable:$true] %s1520
          %1526 = dma.vmem_to_hbm [thread:$0]  %s1521, 8192, %s1519, %s1507, 128, 128, 8
        $region56: #{tpu_custom_call.1} parent=31 // pred_fallthru
          _
      $region32: #{tpu_custom_call.1} parent=5 // pred_fallthru
        _
      %p1527 = scmp.le.s32.totalorder 2, %s16
      // Predicated region
      $region57: #{tpu_custom_call.1} parent=5 // pred_check
        %p1528 = pneg %p1527
      $region58: #{tpu_custom_call.1} parent=5 // pred_check_branch
        %1530 = sbr.rel (%p1528) target = $region60
      $region59: #{tpu_custom_call.1} parent=5 // pred_region
        %s1531 = ssub.s32 %s16, 2
        // Predicated region
        $region61: #{tpu_custom_call.1} parent=59 // pred_check
          %p1532 = pneg %p132
        $region62: #{tpu_custom_call.1} parent=59 // pred_check_branch
          %1534 = sbr.rel (%p1532) target = $region64
        $region63: #{tpu_custom_call.1} parent=59 // pred_region
          %s1535 = sand.u32 %s117, 1
          %s1536 = scalar_lea.sflag [#allocation4], %s1535
          %s1537 = sand.u32 %s117, 1
          %s1538 = smul.addr %s1537, 512
          %s1539 = scalar_lea.vmem [#allocation8], %s1538
          %1540 = dma.done %s1536, 8192
        $region64: #{tpu_custom_call.1} parent=59 // pred_fallthru
          _
      $region60: #{tpu_custom_call.1} parent=5 // pred_fallthru
        _
    $region6: #{tpu_custom_call.1} parent=1 // loop_footer
      %s20 = sadd.s32 1, %s16
    $region7: #{tpu_custom_call.1} parent=1 // loop_footer_branch
      %15 = sbr.rel target = $region3
    $region8: #{tpu_custom_call.1} parent=1 // loop_exit
      _
    %1541 = vsyncpa [#allocation3], 1
    %s1542 = scalar_lea.sflag [#allocation3], 1
    %1543 = vsyncpa %s1542, 1
    %1544 = vsyncpa [#allocation6], 1
    %1545 = vsyncpa [#allocation4], 1
    %s1546 = scalar_lea.sflag [#allocation4], 1
    %1547 = vsyncpa %s1546, 1

</llo_original>
